<compile_context>
chip_gen: v7x
topology: tpu7x:2x2x1
jax: 0.10.0
libtpu: 0.0.40
codegen_flags: <defaults>
</compile_context>

<pallas_src>
import functools

import jax
import jax.numpy as jnp
from jax import lax
from jax.experimental import pallas as pl
from jax.experimental.pallas import tpu as pltpu


def _round_up(x, m):
    return (x + m - 1) // m * m


def _tpu_vmem_capacity_bytes():
    try:
        return int(pltpu.get_tpu_info().vmem_capacity_bytes)
    except Exception:
        return 64 * 1024 * 1024  # conservative fallback: v7x per-TensorCore VMEM


def _vmem_bytes(shape, itemsize):
    """Approximate VMEM footprint of one buffer incl. (sublane, 128) layout padding."""
    pad = list(shape)
    pad[-1] = _round_up(pad[-1], 128)
    if len(pad) >= 2:
        sublane = 8 * max(1, 4 // itemsize)  # 8 for f32, 16 for bf16, 32 for int8
        pad[-2] = _round_up(pad[-2], sublane)
    n = 1
    for d in pad:
        n *= d
    return n * itemsize


def _vmem_limit(need_bytes, vmem_target):
    # Explicit scoped-VMEM request: 2x the estimated need, floored at 32 MiB,
    # capped at ~75% of the chip's physical VMEM (96 MiB v5e/v6e, 48 MiB v7x).
    return int(min(vmem_target, max(32 * 1024 * 1024, 2 * need_bytes)))


def _pick_tile_h(Ho, Wo, Cpad, KKCpad, y_isz, budget_bytes):
    """Largest divisor of Ho whose per-tile working set fits the VMEM budget.

    No artificial cap: per-grid-step overhead (~0.35 us) makes bigger tiles
    strictly better as long as they fit. Prefers multiples of 8 so TR = TH*Wo
    and row starts stay sublane-friendly.
    """
    def per_tile(d):
        tr = d * Wo
        return tr * (2 * Cpad * y_isz   # double-buffered output tile
                     + KKCpad * 4       # im2col patch working set
                     + Cpad * 4)        # f32 accumulator working set
    fitting = [d for d in range(1, Ho + 1) if Ho % d == 0 and per_tile(d) <= budget_bytes]
    if not fitting:
        return 1
    mult8 = [d for d in fitting if d % 8 == 0]
    return max(mult8) if mult8 else max(fitting)


def _pick_tile_batch(NT, TR, Cpad, in_isz, out_isz, vmem_target):
    """How many pass-1 tiles each pass-2 grid step streams (bigger = better)."""
    budget = max(4 * 1024 * 1024, vmem_target - 4 * 1024 * 1024)
    def per_step(tb):
        return 2 * (_vmem_bytes((tb, TR, Cpad), in_isz)
                    + _vmem_bytes((tb, TR, Cpad), out_isz))
    fitting = [d for d in range(1, NT + 1) if NT % d == 0 and per_step(d) <= budget]
    return max(fitting) if fitting else 1


# ---------------------------------------------------------------------------
# Pass 1: conv (single MXU matmul per tile) + bias + per-tile BN statistics.
# ---------------------------------------------------------------------------
def _conv_stats_kernel(x_ref, w_ref, b_ref, y_ref, st_ref, *,
                       K, stride, TH, Wo, Cin, KKC, KKCpad, mxu_dtype, inv_rows):
    # x_ref : (S*S, Hpl, Wpl, Cin)  padded phase planes of one image (revisited over t)
    # w_ref : (KKCpad, Cpad)        im2col weight, zero-padded rows & channels
    # b_ref : (1, Cpad)             conv bias (f32), channel-padded
    # y_ref : (1, TR, Cpad)         pre-norm output tile (lane-dense, input dtype)
    # st_ref: (1, 2, Cpad)          per-tile [sum, sum((x - tile_mean)^2)]
    s = stride
    TR = TH * Wo
    t = pl.program_id(1)
    row0 = pl.multiple_of(t * TH, TH)

    # im2col in registers -- no VMEM scratch round-trip.  All slices are
    # unit-stride thanks to the wrapper-side phase-plane decomposition.
    taps = []
    for kh in range(K):
        for kw in range(K):
            plane = (kh % s) * s + (kw % s)
            rh, cw = kh // s, kw // s
            taps.append(x_ref[plane, pl.ds(row0 + rh, TH), cw:cw + Wo, :])  # (TH, Wo, Cin)
    if KKCpad > KKC:
        # Zero-fill the padded contraction columns -> lane-dense MXU operand.
        taps.append(jnp.zeros((TH, Wo, KKCpad - KKC), dtype=x_ref.dtype))
    pmat = jnp.concatenate(taps, axis=-1).reshape(TR, KKCpad)

    # One MXU matmul (contraction = KKCpad), f32 accumulation.
    acc = jnp.dot(pmat.astype(mxu_dtype), w_ref[...],
                  preferred_element_type=jnp.float32)
    acc = acc + b_ref[...]

    y_ref[0] = acc.astype(y_ref.dtype)

    # BN partial stats in the same sweep: tile sum + sum of squared deviations
    # from the *tile* mean (combined across tiles with Chan's formula in the
    # wrapper -> no E[x^2]-E[x]^2 cancellation).  Single (2, Cpad) store.
    tsum = jnp.sum(acc, axis=0, keepdims=True)            # (1, Cpad)
    dev = acc - tsum * inv_rows
    tm2 = jnp.sum(dev * dev, axis=0, keepdims=True)       # (1, Cpad)
    st_ref[0] = jnp.concatenate([tsum, tm2], axis=0)      # (2, Cpad) in one store


# ---------------------------------------------------------------------------
# Pass 2: BatchNorm2d (global batch stats, affine=False) + ReLU.
# ---------------------------------------------------------------------------
def _bn_relu_kernel(y_ref, s_ref, o_ref, *, eps):
    # y_ref: (TB, TR, Cpad) pre-norm tiles; s_ref: (2, Cpad) global [mean, var].
    mean = s_ref[0:1, :]
    var = s_ref[1:2, :]
    inv_std = lax.rsqrt(var + eps)                         # (1, Cpad)
    scale = inv_std.reshape(1, 1, -1)
    shift = (-mean * inv_std).reshape(1, 1, -1)
    y = y_ref[...].astype(jnp.float32) * scale + shift
    o_ref[...] = jnp.maximum(y, 0.0).astype(o_ref.dtype)


def conv_module_forward(x_nchw, weight_oihw, bias, *, stride=1, padding=0, eps=1e-5):
    """ConvModule forward. x: (N, Cin, H, W); weight: (Cout, Cin, K, K); bias: (Cout,)."""
    N, Cin, H, W = x_nchw.shape
    Cout = weight_oihw.shape[0]
    K = weight_oihw.shape[2]
    s = int(stride)
    Ho = (H + 2 * padding - K) // s + 1
    Wo = (W + 2 * padding - K) // s + 1
    KKC = K * K * Cin
    KKCpad = _round_up(KKC, 128)            # lane-dense contraction axis
    S2 = s * s
    Cpad = _round_up(Cout, 128)             # lane-dense channel axis

    x_dtype = x_nchw.dtype
    # bf16 MXU operands only once the contraction is big enough to be MXU-bound.
    use_bf16_mxu = (Cin >= 64) and (x_dtype == jnp.float32)
    mxu_dtype = jnp.bfloat16 if use_bf16_mxu else x_dtype
    x_isz = jnp.dtype(x_dtype).itemsize
    w_isz = jnp.dtype(mxu_dtype).itemsize
    y_isz = x_isz                           # y_pre stored in input dtype

    vmem_cap = _tpu_vmem_capacity_bytes()
    vmem_target = int(vmem_cap * 0.75)      # ~96 MiB on v5e/v6e, ~48 MiB on v7x

    # ---- wrapper-side layout glue (XLA): NCHW->NHWC, zero pad, phase planes ----
    x_nhwc = jnp.transpose(x_nchw, (0, 2, 3, 1))
    x_pad = jnp.pad(x_nhwc, ((0, 0), (padding, padding), (padding, padding), (0, 0)))
    Hpl = (K - 1) // s + Ho
    Wpl = (K - 1) // s + Wo
    if s == 1:
        x_planes = x_pad                                             # (N, Hpl, Wpl, Cin)
    else:
        hp2 = max(Hpl * s, x_pad.shape[1])
        wp2 = max(Wpl * s, x_pad.shape[2])
        x2 = jnp.pad(x_pad, ((0, 0), (0, hp2 - x_pad.shape[1]),
                             (0, wp2 - x_pad.shape[2]), (0, 0)))
        planes = [x2[:, a:a + Hpl * s:s, b:b + Wpl * s:s, :]
                  for a in range(s) for b in range(s)]
        x_planes = jnp.stack(planes, axis=1).reshape(N * S2, Hpl, Wpl, Cin)

    # HWIO im2col weight, padded on both the contraction and channel axes.
    w2 = jnp.transpose(weight_oihw, (2, 3, 1, 0)).reshape(KKC, Cout)
    w2 = jnp.pad(w2, ((0, KKCpad - KKC), (0, Cpad - Cout))).astype(mxu_dtype)
    b2 = jnp.pad(bias.reshape(1, Cout), ((0, 0), (0, Cpad - Cout))).astype(jnp.float32)

    # -------- tiling (generation-aware VMEM budget) --------
    x_blk_shape = (S2, Hpl, Wpl, Cin)
    w_block_bytes = _vmem_bytes((KKCpad, Cpad), w_isz)
    fixed1 = (2 * _vmem_bytes(x_blk_shape, x_isz)
              + 2 * w_block_bytes
              + 2 * _vmem_bytes((1, Cpad), 4))
    budget1 = max(4 * 1024 * 1024, vmem_target - fixed1 - 4 * 1024 * 1024)
    TH = _pick_tile_h(Ho, Wo, Cpad, KKCpad, y_isz, budget1)
    num_t = Ho // TH
    NT = N * num_t
    TR = TH * Wo
    count = N * Ho * Wo

    # -------- pass 1: conv + bias + partial BN stats --------
    x_spec = pl.BlockSpec((S2, Hpl, Wpl, Cin), lambda n, t: (n, 0, 0, 0))
    # Constant index_map -> a second pipeline buffer is pure VMEM waste; only
    # worth expressing when the weight block is big enough to matter.
    single_buf_w = w_block_bytes > (1 << 20)
    if single_buf_w:
        w_spec = pl.BlockSpec((KKCpad, Cpad), lambda n, t: (0, 0),
                              pipeline_mode=pl.Buffered(1))
        b_spec = pl.BlockSpec((1, Cpad), lambda n, t: (0, 0),
                              pipeline_mode=pl.Buffered(1))
    else:
        w_spec = pl.BlockSpec((KKCpad, Cpad), lambda n, t: (0, 0))
        b_spec = pl.BlockSpec((1, Cpad), lambda n, t: (0, 0))
    y_spec = pl.BlockSpec((1, TR, Cpad), lambda n, t: (n * num_t + t, 0, 0))
    st_spec = pl.BlockSpec((1, 2, Cpad), lambda n, t: (n * num_t + t, 0, 0))

    w_bufs = 1 if single_buf_w else 2
    need1 = (2 * _vmem_bytes(x_blk_shape, x_isz)
             + w_bufs * w_block_bytes
             + w_bufs * _vmem_bytes((1, Cpad), 4)
             + 2 * _vmem_bytes((1, TR, Cpad), y_isz)
             + 2 * _vmem_bytes((1, 2, Cpad), 4)
             + _vmem_bytes((TR, KKCpad), 4)        # in-register/scratch patch
             + _vmem_bytes((TR, Cpad), 4))         # f32 accumulator
    conv_cost = pl.CostEstimate(
        flops=2 * NT * TR * KKCpad * Cpad + 6 * NT * TR * Cpad,
        transcendentals=0,
        bytes_accessed=int(x_planes.size * x_isz + KKCpad * Cpad * w_isz + Cpad * 4
                           + NT * TR * Cpad * y_isz + NT * 2 * Cpad * 4),
    )
    # Megacore: shard over images; sharding t would duplicate the full-image DMA
    # (x's index_map ignores t) -- worst on v7x's 64 MiB VMEM.
    dims1 = ("parallel", "arbitrary") if N >= 2 else ("parallel", "parallel")

    y_pre, st_part = pl.pallas_call(
        functools.partial(_conv_stats_kernel, K=K, stride=s, TH=TH, Wo=Wo,
                          Cin=Cin, KKC=KKC, KKCpad=KKCpad,
                          mxu_dtype=mxu_dtype, inv_rows=1.0 / float(TR)),
        grid_spec=pltpu.PrefetchScalarGridSpec(
            num_scalar_prefetch=0,
            grid=(N, num_t),
            in_specs=[x_spec, w_spec, b_spec],
            out_specs=[y_spec, st_spec],
        ),
        out_shape=(jax.ShapeDtypeStruct((NT, TR, Cpad), x_dtype),
                   jax.ShapeDtypeStruct((NT, 2, Cpad), jnp.float32)),
        compiler_params=pltpu.CompilerParams(
            dimension_semantics=dims1,
            vmem_limit_bytes=_vmem_limit(need1, vmem_target)),
        cost_estimate=conv_cost,
    )(x_planes, w2, b2)

    # Tiny per-channel combine of the per-tile stats (Chan's parallel formula).
    sums = st_part[:, 0, :]                                  # (NT, Cpad)
    m2s = st_part[:, 1, :]                                   # (NT, Cpad)
    mean = jnp.sum(sums, axis=0) / float(count)              # (Cpad,)
    tile_mean = sums / float(TR)
    m2 = jnp.sum(m2s, axis=0) + float(TR) * jnp.sum(
        jnp.square(tile_mean - mean[None, :]), axis=0)
    var = m2 / float(count)                                  # biased (PyTorch BN norm)
    stats = jnp.stack([mean, var], axis=0)                   # (2, Cpad), f32

    # -------- pass 2: normalize + ReLU, streaming TB tiles per step --------
    TB = _pick_tile_batch(NT, TR, Cpad, y_isz, x_isz, vmem_target)
    grid2 = NT // TB

    y2_spec = pl.BlockSpec((TB, TR, Cpad), lambda i: (i, 0, 0))
    s2_spec = pl.BlockSpec((2, Cpad), lambda i: (0, 0))
    o2_spec = pl.BlockSpec((TB, TR, Cpad), lambda i: (i, 0, 0))

    need2 = (2 * _vmem_bytes((TB, TR, Cpad), y_isz)
             + 2 * _vmem_bytes((TB, TR, Cpad), x_isz)
             + 2 * _vmem_bytes((2, Cpad), 4))
    bn_cost = pl.CostEstimate(
        flops=3 * NT * TR * Cpad,
        transcendentals=grid2 * Cpad,
        bytes_accessed=int(NT * TR * Cpad * (y_isz + x_isz) + 2 * Cpad * 4),
    )

    out_buf = pl.pallas_call(
        functools.partial(_bn_relu_kernel, eps=float(eps)),
        grid_spec=pltpu.PrefetchScalarGridSpec(
            num_scalar_prefetch=0,
            grid=(grid2,),
            in_specs=[y2_spec, s2_spec],
            out_specs=o2_spec,
        ),
        out_shape=jax.ShapeDtypeStruct((NT, TR, Cpad), x_dtype),
        compiler_params=pltpu.CompilerParams(
            dimension_semantics=("parallel",),
            vmem_limit_bytes=_vmem_limit(need2, vmem_target)),
        cost_estimate=bn_cost,
    )(y_pre, stats)

    # Final layout glue: drop channel padding, back to NCHW.
    out = out_buf.reshape(N, Ho, Wo, Cpad)[..., :Cout]
    return jnp.transpose(out, (0, 3, 1, 2))


def _reference_forward(x_nchw, weight_oihw, bias, *, stride, padding, eps=1e-5):
    """Plain-JAX reference (same math as the PyTorch module in training mode)."""
    y = lax.conv_general_dilated(
        x_nchw.astype(jnp.float32), weight_oihw.astype(jnp.float32),
        window_strides=(stride, stride),
        padding=[(padding, padding), (padding, padding)],
        dimension_numbers=("NCHW", "OIHW", "NCHW"),
    ) + bias.reshape(1, -1, 1, 1)
    mean = jnp.mean(y, axis=(0, 2, 3), keepdims=True)
    var = jnp.mean((y - mean) ** 2, axis=(0, 2, 3), keepdims=True)
    y = (y - mean) * lax.rsqrt(var + eps)
    return jnp.maximum(y, 0.0)


if __name__ == "__main__":
    # ConvModule(in_channels=4, out_channels=8, kernel_size=3, stride=1, padding=1,
    # bias=True) on x of shape (2, 4, 16, 16).
    N, Cin, H, W = 2, 4, 16, 16
    Cout, K, stride, padding = 8, 3, 1, 1

    key = jax.random.PRNGKey(0)
    kx, kw, kb = jax.random.split(key, 3)
    x = jax.random.normal(kx, (N, Cin, H, W), dtype=jnp.float32)
    fan_in = Cin * K * K
    bound = 1.0 / (fan_in ** 0.5)
    weight = jax.random.uniform(kw, (Cout, Cin, K, K), minval=-bound, maxval=bound,
                                dtype=jnp.float32)
    bias = jax.random.uniform(kb, (Cout,), minval=-bound, maxval=bound, dtype=jnp.float32)

    fwd = jax.jit(functools.partial(conv_module_forward, stride=stride, padding=padding))
    out = jax.block_until_ready(fwd(x, weight, bias))

    ref = _reference_forward(x, weight, bias, stride=stride, padding=padding)
    assert out.shape == (N, Cout, H, W)
    err = float(jnp.max(jnp.abs(out - ref)))
    assert err < 2e-4, f"Pallas output mismatch vs reference: max abs err = {err}"

    print("KERNEL_OK")
</pallas_src>

<mosaic_0001>
module attributes {stable_mosaic.version = 11 : i64} {
  func.func @_conv_stats_kernel(%arg0: i32, %arg1: i32, %arg2: memref<1x18x18x4xf32, #tpu.memory_space<vmem>>, %arg3: memref<128x128xf32, #tpu.memory_space<vmem>>, %arg4: memref<1x128xf32, #tpu.memory_space<vmem>>, %arg5: memref<1x256x128xf32, #tpu.memory_space<vmem>>, %arg6: memref<1x2x128xf32, #tpu.memory_space<vmem>>) attributes {dimension_semantics = [#tpu.dimension_semantics<parallel>, #tpu.dimension_semantics<arbitrary>], iteration_bounds = array<i64: 2, 1>, scalar_prefetch = 0 : i64, scratch_operands = 0 : i64, tpu.core_type = #tpu.core_type<tc>, window_params = [{transform_indices = @transform_0, window_bounds = array<i64: 1, 18, 18, 4>}, {pipeline_mode = #tpu.pipeline_mode<synchronous>, transform_indices = @transform_1, window_bounds = array<i64: 128, 128>}, {pipeline_mode = #tpu.pipeline_mode<synchronous>, transform_indices = @transform_2, window_bounds = array<i64: 1, 128>}, {transform_indices = @transform_3, window_bounds = array<i64: 1, 256, 128>}, {transform_indices = @transform_4, window_bounds = array<i64: 1, 2, 128>}]} {
    %c16_i32 = arith.constant 16 : i32
    %0 = arith.muli %arg1, %c16_i32 : i32
    %1 = tpu.assume_multiple %0, 16 : i32
    %c0_i32 = arith.constant 0 : i32
    %2 = arith.addi %1, %c0_i32 : i32
    %c0 = arith.constant 0 : index
    %3 = arith.index_cast %2 : i32 to index
    %c0_0 = arith.constant 0 : index
    %c0_1 = arith.constant 0 : index
    %4 = vector.load %arg2[%c0, %3, %c0_0, %c0_1] : memref<1x18x18x4xf32, #tpu.memory_space<vmem>>, vector<1x16x16x4xf32>
    %5 = vector.shape_cast %4 : vector<1x16x16x4xf32> to vector<16x16x4xf32>
    %c0_i32_2 = arith.constant 0 : i32
    %6 = arith.addi %1, %c0_i32_2 : i32
    %c0_3 = arith.constant 0 : index
    %7 = arith.index_cast %6 : i32 to index
    %c1 = arith.constant 1 : index
    %c0_4 = arith.constant 0 : index
    %8 = vector.load %arg2[%c0_3, %7, %c1, %c0_4] : memref<1x18x18x4xf32, #tpu.memory_space<vmem>>, vector<1x16x16x4xf32>
    %9 = vector.shape_cast %8 : vector<1x16x16x4xf32> to vector<16x16x4xf32>
    %c0_i32_5 = arith.constant 0 : i32
    %10 = arith.addi %1, %c0_i32_5 : i32
    %c0_6 = arith.constant 0 : index
    %11 = arith.index_cast %10 : i32 to index
    %c2 = arith.constant 2 : index
    %c0_7 = arith.constant 0 : index
    %12 = vector.load %arg2[%c0_6, %11, %c2, %c0_7] : memref<1x18x18x4xf32, #tpu.memory_space<vmem>>, vector<1x16x16x4xf32>
    %13 = vector.shape_cast %12 : vector<1x16x16x4xf32> to vector<16x16x4xf32>
    %c1_i32 = arith.constant 1 : i32
    %14 = arith.addi %1, %c1_i32 : i32
    %c0_8 = arith.constant 0 : index
    %15 = arith.index_cast %14 : i32 to index
    %c0_9 = arith.constant 0 : index
    %c0_10 = arith.constant 0 : index
    %16 = vector.load %arg2[%c0_8, %15, %c0_9, %c0_10] : memref<1x18x18x4xf32, #tpu.memory_space<vmem>>, vector<1x16x16x4xf32>
    %17 = vector.shape_cast %16 : vector<1x16x16x4xf32> to vector<16x16x4xf32>
    %c1_i32_11 = arith.constant 1 : i32
    %18 = arith.addi %1, %c1_i32_11 : i32
    %c0_12 = arith.constant 0 : index
    %19 = arith.index_cast %18 : i32 to index
    %c1_13 = arith.constant 1 : index
    %c0_14 = arith.constant 0 : index
    %20 = vector.load %arg2[%c0_12, %19, %c1_13, %c0_14] : memref<1x18x18x4xf32, #tpu.memory_space<vmem>>, vector<1x16x16x4xf32>
    %21 = vector.shape_cast %20 : vector<1x16x16x4xf32> to vector<16x16x4xf32>
    %c1_i32_15 = arith.constant 1 : i32
    %22 = arith.addi %1, %c1_i32_15 : i32
    %c0_16 = arith.constant 0 : index
    %23 = arith.index_cast %22 : i32 to index
    %c2_17 = arith.constant 2 : index
    %c0_18 = arith.constant 0 : index
    %24 = vector.load %arg2[%c0_16, %23, %c2_17, %c0_18] : memref<1x18x18x4xf32, #tpu.memory_space<vmem>>, vector<1x16x16x4xf32>
    %25 = vector.shape_cast %24 : vector<1x16x16x4xf32> to vector<16x16x4xf32>
    %c2_i32 = arith.constant 2 : i32
    %26 = arith.addi %1, %c2_i32 : i32
    %c0_19 = arith.constant 0 : index
    %27 = arith.index_cast %26 : i32 to index
    %c0_20 = arith.constant 0 : index
    %c0_21 = arith.constant 0 : index
    %28 = vector.load %arg2[%c0_19, %27, %c0_20, %c0_21] : memref<1x18x18x4xf32, #tpu.memory_space<vmem>>, vector<1x16x16x4xf32>
    %29 = vector.shape_cast %28 : vector<1x16x16x4xf32> to vector<16x16x4xf32>
    %c2_i32_22 = arith.constant 2 : i32
    %30 = arith.addi %1, %c2_i32_22 : i32
    %c0_23 = arith.constant 0 : index
    %31 = arith.index_cast %30 : i32 to index
    %c1_24 = arith.constant 1 : index
    %c0_25 = arith.constant 0 : index
    %32 = vector.load %arg2[%c0_23, %31, %c1_24, %c0_25] : memref<1x18x18x4xf32, #tpu.memory_space<vmem>>, vector<1x16x16x4xf32>
    %33 = vector.shape_cast %32 : vector<1x16x16x4xf32> to vector<16x16x4xf32>
    %c2_i32_26 = arith.constant 2 : i32
    %34 = arith.addi %1, %c2_i32_26 : i32
    %c0_27 = arith.constant 0 : index
    %35 = arith.index_cast %34 : i32 to index
    %c2_28 = arith.constant 2 : index
    %c0_29 = arith.constant 0 : index
    %36 = vector.load %arg2[%c0_27, %35, %c2_28, %c0_29] : memref<1x18x18x4xf32, #tpu.memory_space<vmem>>, vector<1x16x16x4xf32>
    %37 = vector.shape_cast %36 : vector<1x16x16x4xf32> to vector<16x16x4xf32>
    %cst = arith.constant 0.000000e+00 : f32
    %38 = vector.broadcast %cst : f32 to vector<16x16x92xf32>
    %39 = tpu.concatenate %5, %9, %13, %17, %21, %25, %29, %33, %37, %38 in 2 : vector<16x16x4xf32>, vector<16x16x4xf32>, vector<16x16x4xf32>, vector<16x16x4xf32>, vector<16x16x4xf32>, vector<16x16x4xf32>, vector<16x16x4xf32>, vector<16x16x4xf32>, vector<16x16x4xf32>, vector<16x16x92xf32> -> vector<16x16x128xf32>
    %40 = vector.shape_cast %39 : vector<16x16x128xf32> to vector<256x128xf32>
    %c0_30 = arith.constant 0 : index
    %c0_31 = arith.constant 0 : index
    %41 = vector.load %arg3[%c0_30, %c0_31] : memref<128x128xf32, #tpu.memory_space<vmem>>, vector<128x128xf32>
    %cst_32 = arith.constant dense<0.000000e+00> : vector<256x128xf32>
    %42 = tpu.matmul %40, %41, %cst_32 {dimension_numbers = #tpu.dot_dimension_numbers<[1], [0], [0], [1], [0, 0, 1, 1], [], []>} : vector<256x128xf32>, vector<128x128xf32>, vector<256x128xf32> -> vector<256x128xf32>
    %c0_33 = arith.constant 0 : index
    %c0_34 = arith.constant 0 : index
    %43 = vector.load %arg4[%c0_33, %c0_34] : memref<1x128xf32, #tpu.memory_space<vmem>>, vector<1x128xf32>
    %44 = vector.broadcast %43 : vector<1x128xf32> to vector<256x128xf32>
    %45 = arith.addf %42, %44 : vector<256x128xf32>
    %c0_35 = arith.constant 0 : index
    %c0_36 = arith.constant 0 : index
    %c0_37 = arith.constant 0 : index
    %46 = vector.load %arg5[%c0_35, %c0_36, %c0_37] : memref<1x256x128xf32, #tpu.memory_space<vmem>>, vector<1x256x128xf32>
    %47 = vector.shape_cast %46 : vector<1x256x128xf32> to vector<256x128xf32>
    %48 = vector.shape_cast %45 : vector<256x128xf32> to vector<1x256x128xf32>
    tpu.vector_store %arg5[%c0_35, %c0_36, %c0_37], %48 {strides = array<i32>} : memref<1x256x128xf32, #tpu.memory_space<vmem>>, vector<1x256x128xf32>,
    %cst_38 = arith.constant dense<0.000000e+00> : vector<128xf32>
    %49 = vector.multi_reduction <add>, %45, %cst_38 [0] : vector<256x128xf32> to vector<128xf32>
    %50 = vector.shape_cast %49 : vector<128xf32> to vector<1x128xf32>
    %cst_39 = arith.constant 3.906250e-03 : f32
    %51 = vector.broadcast %cst_39 : f32 to vector<1x128xf32>
    %52 = arith.mulf %50, %51 : vector<1x128xf32>
    %53 = vector.broadcast %52 : vector<1x128xf32> to vector<256x128xf32>
    %54 = arith.subf %45, %53 : vector<256x128xf32>
    %55 = arith.mulf %54, %54 : vector<256x128xf32>
    %cst_40 = arith.constant dense<0.000000e+00> : vector<128xf32>
    %56 = vector.multi_reduction <add>, %55, %cst_40 [0] : vector<256x128xf32> to vector<128xf32>
    %57 = vector.shape_cast %56 : vector<128xf32> to vector<1x128xf32>
    %58 = tpu.concatenate %50, %57 in 0 : vector<1x128xf32>, vector<1x128xf32> -> vector<2x128xf32>
    %c0_41 = arith.constant 0 : index
    %c0_42 = arith.constant 0 : index
    %c0_43 = arith.constant 0 : index
    %59 = vector.load %arg6[%c0_41, %c0_42, %c0_43] : memref<1x2x128xf32, #tpu.memory_space<vmem>>, vector<1x2x128xf32>
    %60 = vector.shape_cast %59 : vector<1x2x128xf32> to vector<2x128xf32>
    %61 = vector.shape_cast %58 : vector<2x128xf32> to vector<1x2x128xf32>
    tpu.vector_store %arg6[%c0_41, %c0_42, %c0_43], %61 {strides = array<i32>} : memref<1x2x128xf32, #tpu.memory_space<vmem>>, vector<1x2x128xf32>,
    return
  }
  func.func @transform_0(%arg0: i32, %arg1: i32) -> (i32, i32, i32, i32) {
    %c0_i32 = arith.constant 0 : i32
    %c0_i32_0 = arith.constant 0 : i32
    %c0_i32_1 = arith.constant 0 : i32
    %c0_i32_2 = arith.constant 0 : i32
    return %arg0, %c0_i32, %c0_i32_0, %c0_i32_1 : i32, i32, i32, i32
  }
  func.func @transform_1(%arg0: i32, %arg1: i32) -> (i32, i32) {
    %c0_i32 = arith.constant 0 : i32
    %c0_i32_0 = arith.constant 0 : i32
    %c0_i32_1 = arith.constant 0 : i32
    return %c0_i32, %c0_i32_0 : i32, i32
  }
  func.func @transform_2(%arg0: i32, %arg1: i32) -> (i32, i32) {
    %c0_i32 = arith.constant 0 : i32
    %c0_i32_0 = arith.constant 0 : i32
    %c0_i32_1 = arith.constant 0 : i32
    return %c0_i32, %c0_i32_0 : i32, i32
  }
  func.func @transform_3(%arg0: i32, %arg1: i32) -> (i32, i32, i32) {
    %c1_i32 = arith.constant 1 : i32
    %0 = arith.muli %arg0, %c1_i32 : i32
    %1 = arith.addi %0, %arg1 : i32
    %c0_i32 = arith.constant 0 : i32
    %c0_i32_0 = arith.constant 0 : i32
    %c0_i32_1 = arith.constant 0 : i32
    return %1, %c0_i32, %c0_i32_0 : i32, i32, i32
  }
  func.func @transform_4(%arg0: i32, %arg1: i32) -> (i32, i32, i32) {
    %c1_i32 = arith.constant 1 : i32
    %0 = arith.muli %arg0, %c1_i32 : i32
    %1 = arith.addi %0, %arg1 : i32
    %c0_i32 = arith.constant 0 : i32
    %c0_i32_0 = arith.constant 0 : i32
    %c0_i32_1 = arith.constant 0 : i32
    return %1, %c0_i32, %c0_i32_0 : i32, i32, i32
  }
}

module attributes {stable_mosaic.version = 11 : i64} {
  func.func @_bn_relu_kernel(%arg0: i32, %arg1: memref<2x256x128xf32, #tpu.memory_space<vmem>>, %arg2: memref<2x128xf32, #tpu.memory_space<vmem>>, %arg3: memref<2x256x128xf32, #tpu.memory_space<vmem>>) attributes {dimension_semantics = [#tpu.dimension_semantics<parallel>], iteration_bounds = array<i64: 1>, scalar_prefetch = 0 : i64, scratch_operands = 0 : i64, tpu.core_type = #tpu.core_type<tc>, window_params = [{transform_indices = @transform_0, window_bounds = array<i64: 2, 256, 128>}, {pipeline_mode = #tpu.pipeline_mode<synchronous>, transform_indices = @transform_1, window_bounds = array<i64: 2, 128>}, {transform_indices = @transform_2, window_bounds = array<i64: 2, 256, 128>}]} {
    %c0 = arith.constant 0 : index
    %c0_0 = arith.constant 0 : index
    %0 = vector.load %arg2[%c0, %c0_0] : memref<2x128xf32, #tpu.memory_space<vmem>>, vector<1x128xf32>
    %c1 = arith.constant 1 : index
    %c0_1 = arith.constant 0 : index
    %1 = vector.load %arg2[%c1, %c0_1] : memref<2x128xf32, #tpu.memory_space<vmem>>, vector<1x128xf32>
    %cst = arith.constant 9.99999974E-6 : f32
    %2 = vector.broadcast %cst : f32 to vector<1x128xf32>
    %3 = arith.addf %1, %2 : vector<1x128xf32>
    %4 = math.rsqrt %3 : vector<1x128xf32>
    %5 = vector.shape_cast %4 : vector<1x128xf32> to vector<1x1x128xf32>
    %cst_2 = arith.constant 0.000000e+00 : f32
    %6 = vector.broadcast %cst_2 : f32 to vector<1x128xf32>
    %7 = arith.subf %6, %0 : vector<1x128xf32>
    %8 = arith.mulf %7, %4 : vector<1x128xf32>
    %9 = vector.shape_cast %8 : vector<1x128xf32> to vector<1x1x128xf32>
    %c0_3 = arith.constant 0 : index
    %c0_4 = arith.constant 0 : index
    %c0_5 = arith.constant 0 : index
    %10 = vector.load %arg1[%c0_3, %c0_4, %c0_5] : memref<2x256x128xf32, #tpu.memory_space<vmem>>, vector<2x256x128xf32>
    %11 = vector.broadcast %5 : vector<1x1x128xf32> to vector<2x256x128xf32>
    %12 = arith.mulf %10, %11 : vector<2x256x128xf32>
    %13 = vector.broadcast %9 : vector<1x1x128xf32> to vector<2x256x128xf32>
    %14 = arith.addf %12, %13 : vector<2x256x128xf32>
    %cst_6 = arith.constant 0.000000e+00 : f32
    %15 = vector.broadcast %cst_6 : f32 to vector<2x256x128xf32>
    %16 = arith.maximumf %14, %15 : vector<2x256x128xf32>
    %c0_7 = arith.constant 0 : index
    %c0_8 = arith.constant 0 : index
    %c0_9 = arith.constant 0 : index
    %17 = vector.load %arg3[%c0_7, %c0_8, %c0_9] : memref<2x256x128xf32, #tpu.memory_space<vmem>>, vector<2x256x128xf32>
    tpu.vector_store %arg3[%c0_7, %c0_8, %c0_9], %16 {strides = array<i32>} : memref<2x256x128xf32, #tpu.memory_space<vmem>>, vector<2x256x128xf32>,
    return
  }
  func.func @transform_0(%arg0: i32) -> (i32, i32, i32) {
    %c0_i32 = arith.constant 0 : i32
    %c0_i32_0 = arith.constant 0 : i32
    %c0_i32_1 = arith.constant 0 : i32
    return %arg0, %c0_i32, %c0_i32_0 : i32, i32, i32
  }
  func.func @transform_1(%arg0: i32) -> (i32, i32) {
    %c0_i32 = arith.constant 0 : i32
    %c0_i32_0 = arith.constant 0 : i32
    %c0_i32_1 = arith.constant 0 : i32
    return %c0_i32, %c0_i32_0 : i32, i32
  }
  func.func @transform_2(%arg0: i32) -> (i32, i32, i32) {
    %c0_i32 = arith.constant 0 : i32
    %c0_i32_0 = arith.constant 0 : i32
    %c0_i32_1 = arith.constant 0 : i32
    return %arg0, %c0_i32, %c0_i32_0 : i32, i32, i32
  }
}

</mosaic_0001>

<llo_original>
// kernel: conv_module_forward.3
$region0: #{conv_module_forward.3}
  #allocation0 [shape = 'u32[]', space=smem, size = 0x4, offset = 0x4, fixed_abs, tag = 'smem constant byte address 0x4 - core index']
  #allocation1 [shape = 'u32[144,128]{1,0:T(1,128)}', space=vmem, size = 0x12000, scoped, tag = 'internal scratch']
  %s0 = inlined_call_operand.vmem [shape: f32[2,256,128], index: 0, kind: input, shape index: {}]
  %s1 = inlined_call_operand.vmem [shape: f32[2,128], index: 1, kind: input, shape index: {}]
  %s2 = inlined_call_operand.vmem [shape: f32[2,256,128], index: 2, kind: output, shape index: {}]
  %s3 = sld [smem:[#allocation0]]
  $region18: #{conv_module_forward.3} parent=0
    _
  %s5 = ssub.s32 1, %s3
  %s6 = scalar_select 0, %s5, %s3
  // Predicated region
  $region2: #{conv_module_forward.3} parent=0 // pred_check
    _
  $region3: #{conv_module_forward.3} parent=0 // pred_check_branch
    %8 = sbr.rel (0) target = $region5
  $region4: #{conv_module_forward.3} parent=0 // pred_region
    _
  $region5: #{conv_module_forward.3} parent=0 // pred_fallthru
    _
  // Predicated region
  $region6: #{conv_module_forward.3} parent=0 // pred_check
    _
  $region7: #{conv_module_forward.3} parent=0 // pred_check_branch
    %10 = sbr.rel (0) target = $region9
  $region8: #{conv_module_forward.3} parent=0 // pred_region
    _
  $region9: #{conv_module_forward.3} parent=0 // pred_fallthru
    _
  %v11 = vld [vmem:[%s1] sm:$0x1]
  %v12 = vld [vmem:[%s1 + $0x1] sm:$0x1]
  %v13 = vadd.f32 %v12, 1e-05
  %v14 = vrsqrt.pop %v13
  %v15 = vsub.f32 0.0, %v11
  %v16 = vmul.f32 %v15, %v14
  %v17 = vld [vmem:[%s0] sm:$0xff]
  %v18 = vld [vmem:[%s0 + $0x8] sm:$0xff]
  %v19 = vld [vmem:[%s0 + $0x10] sm:$0xff]
  %v20 = vld [vmem:[%s0 + $0x18] sm:$0xff]
  %v21 = vld [vmem:[%s0 + $0x20] sm:$0xff]
  %v22 = vld [vmem:[%s0 + $0x28] sm:$0xff]
  %v23 = vld [vmem:[%s0 + $0x30] sm:$0xff]
  %v24 = vld [vmem:[%s0 + $0x38] sm:$0xff]
  %v25 = vld [vmem:[%s0 + $0x40] sm:$0xff]
  %v26 = vld [vmem:[%s0 + $0x48] sm:$0xff]
  %v27 = vld [vmem:[%s0 + $0x50] sm:$0xff]
  %v28 = vld [vmem:[%s0 + $0x58] sm:$0xff]
  %v29 = vld [vmem:[%s0 + $0x60] sm:$0xff]
  %v30 = vld [vmem:[%s0 + $0x68] sm:$0xff]
  %v31 = vld [vmem:[%s0 + $0x70] sm:$0xff]
  %v32 = vld [vmem:[%s0 + $0x78] sm:$0xff]
  %v33 = vld [vmem:[%s0 + $0x80] sm:$0xff]
  %v34 = vld [vmem:[%s0 + $0x88] sm:$0xff]
  %v35 = vld [vmem:[%s0 + $0x90] sm:$0xff]
  %v36 = vld [vmem:[%s0 + $0x98] sm:$0xff]
  %v37 = vld [vmem:[%s0 + $0xa0] sm:$0xff]
  %v38 = vld [vmem:[%s0 + $0xa8] sm:$0xff]
  %v39 = vld [vmem:[%s0 + $0xb0] sm:$0xff]
  %v40 = vld [vmem:[%s0 + $0xb8] sm:$0xff]
  %v41 = vld [vmem:[%s0 + $0xc0] sm:$0xff]
  %v42 = vld [vmem:[%s0 + $0xc8] sm:$0xff]
  %v43 = vld [vmem:[%s0 + $0xd0] sm:$0xff]
  %v44 = vld [vmem:[%s0 + $0xd8] sm:$0xff]
  %v45 = vld [vmem:[%s0 + $0xe0] sm:$0xff]
  %v46 = vld [vmem:[%s0 + $0xe8] sm:$0xff]
  %v47 = vld [vmem:[%s0 + $0xf0] sm:$0xff]
  %v48 = vld [vmem:[%s0 + $0xf8] sm:$0xff]
  %v49 = vld [vmem:[%s0 + $0x100] sm:$0xff]
  %v50 = vld [vmem:[%s0 + $0x108] sm:$0xff]
  %v51 = vld [vmem:[%s0 + $0x110] sm:$0xff]
  %v52 = vld [vmem:[%s0 + $0x118] sm:$0xff]
  %v53 = vld [vmem:[%s0 + $0x120] sm:$0xff]
  %v54 = vld [vmem:[%s0 + $0x128] sm:$0xff]
  %v55 = vld [vmem:[%s0 + $0x130] sm:$0xff]
  %v56 = vld [vmem:[%s0 + $0x138] sm:$0xff]
  %v57 = vld [vmem:[%s0 + $0x140] sm:$0xff]
  %v58 = vld [vmem:[%s0 + $0x148] sm:$0xff]
  %v59 = vld [vmem:[%s0 + $0x150] sm:$0xff]
  %v60 = vld [vmem:[%s0 + $0x158] sm:$0xff]
  %v61 = vld [vmem:[%s0 + $0x160] sm:$0xff]
  %v62 = vld [vmem:[%s0 + $0x168] sm:$0xff]
  %v63 = vld [vmem:[%s0 + $0x170] sm:$0xff]
  %v64 = vld [vmem:[%s0 + $0x178] sm:$0xff]
  %v65 = vld [vmem:[%s0 + $0x180] sm:$0xff]
  %v66 = vld [vmem:[%s0 + $0x188] sm:$0xff]
  %v67 = vld [vmem:[%s0 + $0x190] sm:$0xff]
  %v68 = vld [vmem:[%s0 + $0x198] sm:$0xff]
  %v69 = vld [vmem:[%s0 + $0x1a0] sm:$0xff]
  %v70 = vld [vmem:[%s0 + $0x1a8] sm:$0xff]
  %v71 = vld [vmem:[%s0 + $0x1b0] sm:$0xff]
  %v72 = vld [vmem:[%s0 + $0x1b8] sm:$0xff]
  %v73 = vld [vmem:[%s0 + $0x1c0] sm:$0xff]
  %v74 = vld [vmem:[%s0 + $0x1c8] sm:$0xff]
  %v75 = vld [vmem:[%s0 + $0x1d0] sm:$0xff]
  %v76 = vld [vmem:[%s0 + $0x1d8] sm:$0xff]
  %v77 = vld [vmem:[%s0 + $0x1e0] sm:$0xff]
  %v78 = vld [vmem:[%s0 + $0x1e8] sm:$0xff]
  %v79 = vld [vmem:[%s0 + $0x1f0] sm:$0xff]
  %v80 = vld [vmem:[%s0 + $0x1f8] sm:$0xff]
  %v81 = vlaneseq
  %v82 = vshrl.u32 %v81, 7
  %v83 = vsub.s32 0, %v82
  %v84 = vrot.slane %v14, %v83
  %v85 = vmul.f32 %v17, %v84
  %v86 = vmul.f32 %v18, %v84
  %v87 = vmul.f32 %v19, %v84
  %v88 = vmul.f32 %v20, %v84
  %v89 = vmul.f32 %v21, %v84
  %v90 = vmul.f32 %v22, %v84
  %v91 = vmul.f32 %v23, %v84
  %v92 = vmul.f32 %v24, %v84
  %v93 = vmul.f32 %v25, %v84
  %v94 = vmul.f32 %v26, %v84
  %v95 = vmul.f32 %v27, %v84
  %v96 = vmul.f32 %v28, %v84
  %v97 = vmul.f32 %v29, %v84
  %v98 = vmul.f32 %v30, %v84
  %v99 = vmul.f32 %v31, %v84
  %v100 = vmul.f32 %v32, %v84
  %v101 = vmul.f32 %v33, %v84
  %v102 = vmul.f32 %v34, %v84
  %v103 = vmul.f32 %v35, %v84
  %v104 = vmul.f32 %v36, %v84
  %v105 = vmul.f32 %v37, %v84
  %v106 = vmul.f32 %v38, %v84
  %v107 = vmul.f32 %v39, %v84
  %v108 = vmul.f32 %v40, %v84
  %v109 = vmul.f32 %v41, %v84
  %v110 = vmul.f32 %v42, %v84
  %v111 = vmul.f32 %v43, %v84
  %v112 = vmul.f32 %v44, %v84
  %v113 = vmul.f32 %v45, %v84
  %v114 = vmul.f32 %v46, %v84
  %v115 = vmul.f32 %v47, %v84
  %v116 = vmul.f32 %v48, %v84
  %v117 = vmul.f32 %v49, %v84
  %v118 = vmul.f32 %v50, %v84
  %v119 = vmul.f32 %v51, %v84
  %v120 = vmul.f32 %v52, %v84
  %v121 = vmul.f32 %v53, %v84
  %v122 = vmul.f32 %v54, %v84
  %v123 = vmul.f32 %v55, %v84
  %v124 = vmul.f32 %v56, %v84
  %v125 = vmul.f32 %v57, %v84
  %v126 = vmul.f32 %v58, %v84
  %v127 = vmul.f32 %v59, %v84
  %v128 = vmul.f32 %v60, %v84
  %v129 = vmul.f32 %v61, %v84
  %v130 = vmul.f32 %v62, %v84
  %v131 = vmul.f32 %v63, %v84
  %v132 = vmul.f32 %v64, %v84
  %v133 = vmul.f32 %v65, %v84
  %v134 = vmul.f32 %v66, %v84
  %v135 = vmul.f32 %v67, %v84
  %v136 = vmul.f32 %v68, %v84
  %v137 = vmul.f32 %v69, %v84
  %v138 = vmul.f32 %v70, %v84
  %v139 = vmul.f32 %v71, %v84
  %v140 = vmul.f32 %v72, %v84
  %v141 = vmul.f32 %v73, %v84
  %v142 = vmul.f32 %v74, %v84
  %v143 = vmul.f32 %v75, %v84
  %v144 = vmul.f32 %v76, %v84
  %v145 = vmul.f32 %v77, %v84
  %v146 = vmul.f32 %v78, %v84
  %v147 = vmul.f32 %v79, %v84
  %v148 = vmul.f32 %v80, %v84
  %v149 = vlaneseq
  %v150 = vshrl.u32 %v149, 7
  %v151 = vsub.s32 0, %v150
  %v152 = vrot.slane %v16, %v151
  %v153 = vadd.f32 %v85, %v152
  %v154 = vadd.f32 %v86, %v152
  %v155 = vadd.f32 %v87, %v152
  %v156 = vadd.f32 %v88, %v152
  %v157 = vadd.f32 %v89, %v152
  %v158 = vadd.f32 %v90, %v152
  %v159 = vadd.f32 %v91, %v152
  %v160 = vadd.f32 %v92, %v152
  %v161 = vadd.f32 %v93, %v152
  %v162 = vadd.f32 %v94, %v152
  %v163 = vadd.f32 %v95, %v152
  %v164 = vadd.f32 %v96, %v152
  %v165 = vadd.f32 %v97, %v152
  %v166 = vadd.f32 %v98, %v152
  %v167 = vadd.f32 %v99, %v152
  %v168 = vadd.f32 %v100, %v152
  %v169 = vadd.f32 %v101, %v152
  %v170 = vadd.f32 %v102, %v152
  %v171 = vadd.f32 %v103, %v152
  %v172 = vadd.f32 %v104, %v152
  %v173 = vadd.f32 %v105, %v152
  %v174 = vadd.f32 %v106, %v152
  %v175 = vadd.f32 %v107, %v152
  %v176 = vadd.f32 %v108, %v152
  %v177 = vadd.f32 %v109, %v152
  %v178 = vadd.f32 %v110, %v152
  %v179 = vadd.f32 %v111, %v152
  %v180 = vadd.f32 %v112, %v152
  %v181 = vadd.f32 %v113, %v152
  %v182 = vadd.f32 %v114, %v152
  %v183 = vadd.f32 %v115, %v152
  %v184 = vadd.f32 %v116, %v152
  %v185 = vadd.f32 %v117, %v152
  %v186 = vadd.f32 %v118, %v152
  %v187 = vadd.f32 %v119, %v152
  %v188 = vadd.f32 %v120, %v152
  %v189 = vadd.f32 %v121, %v152
  %v190 = vadd.f32 %v122, %v152
  %v191 = vadd.f32 %v123, %v152
  %v192 = vadd.f32 %v124, %v152
  %v193 = vadd.f32 %v125, %v152
  %v194 = vadd.f32 %v126, %v152
  %v195 = vadd.f32 %v127, %v152
  %v196 = vadd.f32 %v128, %v152
  %v197 = vadd.f32 %v129, %v152
  %v198 = vadd.f32 %v130, %v152
  %v199 = vadd.f32 %v131, %v152
  %v200 = vadd.f32 %v132, %v152
  %v201 = vadd.f32 %v133, %v152
  %v202 = vadd.f32 %v134, %v152
  %v203 = vadd.f32 %v135, %v152
  %v204 = vadd.f32 %v136, %v152
  %v205 = vadd.f32 %v137, %v152
  %v206 = vadd.f32 %v138, %v152
  %v207 = vadd.f32 %v139, %v152
  %v208 = vadd.f32 %v140, %v152
  %v209 = vadd.f32 %v141, %v152
  %v210 = vadd.f32 %v142, %v152
  %v211 = vadd.f32 %v143, %v152
  %v212 = vadd.f32 %v144, %v152
  %v213 = vadd.f32 %v145, %v152
  %v214 = vadd.f32 %v146, %v152
  %v215 = vadd.f32 %v147, %v152
  %v216 = vadd.f32 %v148, %v152
  %v217 = vmax.f32 %v153, 0.0
  %v218 = vmax.f32 %v154, 0.0
  %v219 = vmax.f32 %v155, 0.0
  %v220 = vmax.f32 %v156, 0.0
  %v221 = vmax.f32 %v157, 0.0
  %v222 = vmax.f32 %v158, 0.0
  %v223 = vmax.f32 %v159, 0.0
  %v224 = vmax.f32 %v160, 0.0
  %v225 = vmax.f32 %v161, 0.0
  %v226 = vmax.f32 %v162, 0.0
  %v227 = vmax.f32 %v163, 0.0
  %v228 = vmax.f32 %v164, 0.0
  %v229 = vmax.f32 %v165, 0.0
  %v230 = vmax.f32 %v166, 0.0
  %v231 = vmax.f32 %v167, 0.0
  %v232 = vmax.f32 %v168, 0.0
  %v233 = vmax.f32 %v169, 0.0
  %v234 = vmax.f32 %v170, 0.0
  %v235 = vmax.f32 %v171, 0.0
  %v236 = vmax.f32 %v172, 0.0
  %v237 = vmax.f32 %v173, 0.0
  %v238 = vmax.f32 %v174, 0.0
  %v239 = vmax.f32 %v175, 0.0
  %v240 = vmax.f32 %v176, 0.0
  %v241 = vmax.f32 %v177, 0.0
  %v242 = vmax.f32 %v178, 0.0
  %v243 = vmax.f32 %v179, 0.0
  %v244 = vmax.f32 %v180, 0.0
  %v245 = vmax.f32 %v181, 0.0
  %v246 = vmax.f32 %v182, 0.0
  %v247 = vmax.f32 %v183, 0.0
  %v248 = vmax.f32 %v184, 0.0
  %v249 = vmax.f32 %v185, 0.0
  %v250 = vmax.f32 %v186, 0.0
  %v251 = vmax.f32 %v187, 0.0
  %v252 = vmax.f32 %v188, 0.0
  %v253 = vmax.f32 %v189, 0.0
  %v254 = vmax.f32 %v190, 0.0
  %v255 = vmax.f32 %v191, 0.0
  %v256 = vmax.f32 %v192, 0.0
  %v257 = vmax.f32 %v193, 0.0
  %v258 = vmax.f32 %v194, 0.0
  %v259 = vmax.f32 %v195, 0.0
  %v260 = vmax.f32 %v196, 0.0
  %v261 = vmax.f32 %v197, 0.0
  %v262 = vmax.f32 %v198, 0.0
  %v263 = vmax.f32 %v199, 0.0
  %v264 = vmax.f32 %v200, 0.0
  %v265 = vmax.f32 %v201, 0.0
  %v266 = vmax.f32 %v202, 0.0
  %v267 = vmax.f32 %v203, 0.0
  %v268 = vmax.f32 %v204, 0.0
  %v269 = vmax.f32 %v205, 0.0
  %v270 = vmax.f32 %v206, 0.0
  %v271 = vmax.f32 %v207, 0.0
  %v272 = vmax.f32 %v208, 0.0
  %v273 = vmax.f32 %v209, 0.0
  %v274 = vmax.f32 %v210, 0.0
  %v275 = vmax.f32 %v211, 0.0
  %v276 = vmax.f32 %v212, 0.0
  %v277 = vmax.f32 %v213, 0.0
  %v278 = vmax.f32 %v214, 0.0
  %v279 = vmax.f32 %v215, 0.0
  %v280 = vmax.f32 %v216, 0.0
  %281 = vst [vmem:[%s2] sm:$0xff] %v217
  %282 = vst [vmem:[%s2 + $0x8] sm:$0xff] %v218
  %283 = vst [vmem:[%s2 + $0x10] sm:$0xff] %v219
  %284 = vst [vmem:[%s2 + $0x18] sm:$0xff] %v220
  %285 = vst [vmem:[%s2 + $0x20] sm:$0xff] %v221
  %286 = vst [vmem:[%s2 + $0x28] sm:$0xff] %v222
  %287 = vst [vmem:[%s2 + $0x30] sm:$0xff] %v223
  %288 = vst [vmem:[%s2 + $0x38] sm:$0xff] %v224
  %289 = vst [vmem:[%s2 + $0x40] sm:$0xff] %v225
  %290 = vst [vmem:[%s2 + $0x48] sm:$0xff] %v226
  %291 = vst [vmem:[%s2 + $0x50] sm:$0xff] %v227
  %292 = vst [vmem:[%s2 + $0x58] sm:$0xff] %v228
  %293 = vst [vmem:[%s2 + $0x60] sm:$0xff] %v229
  %294 = vst [vmem:[%s2 + $0x68] sm:$0xff] %v230
  %295 = vst [vmem:[%s2 + $0x70] sm:$0xff] %v231
  %296 = vst [vmem:[%s2 + $0x78] sm:$0xff] %v232
  %297 = vst [vmem:[%s2 + $0x80] sm:$0xff] %v233
  %298 = vst [vmem:[%s2 + $0x88] sm:$0xff] %v234
  %299 = vst [vmem:[%s2 + $0x90] sm:$0xff] %v235
  %300 = vst [vmem:[%s2 + $0x98] sm:$0xff] %v236
  %301 = vst [vmem:[%s2 + $0xa0] sm:$0xff] %v237
  %302 = vst [vmem:[%s2 + $0xa8] sm:$0xff] %v238
  %303 = vst [vmem:[%s2 + $0xb0] sm:$0xff] %v239
  %304 = vst [vmem:[%s2 + $0xb8] sm:$0xff] %v240
  %305 = vst [vmem:[%s2 + $0xc0] sm:$0xff] %v241
  %306 = vst [vmem:[%s2 + $0xc8] sm:$0xff] %v242
  %307 = vst [vmem:[%s2 + $0xd0] sm:$0xff] %v243
  %308 = vst [vmem:[%s2 + $0xd8] sm:$0xff] %v244
  %309 = vst [vmem:[%s2 + $0xe0] sm:$0xff] %v245
  %310 = vst [vmem:[%s2 + $0xe8] sm:$0xff] %v246
  %311 = vst [vmem:[%s2 + $0xf0] sm:$0xff] %v247
  %312 = vst [vmem:[%s2 + $0xf8] sm:$0xff] %v248
  %313 = vst [vmem:[%s2 + $0x100] sm:$0xff] %v249
  %314 = vst [vmem:[%s2 + $0x108] sm:$0xff] %v250
  %315 = vst [vmem:[%s2 + $0x110] sm:$0xff] %v251
  %316 = vst [vmem:[%s2 + $0x118] sm:$0xff] %v252
  %317 = vst [vmem:[%s2 + $0x120] sm:$0xff] %v253
  %318 = vst [vmem:[%s2 + $0x128] sm:$0xff] %v254
  %319 = vst [vmem:[%s2 + $0x130] sm:$0xff] %v255
  %320 = vst [vmem:[%s2 + $0x138] sm:$0xff] %v256
  %321 = vst [vmem:[%s2 + $0x140] sm:$0xff] %v257
  %322 = vst [vmem:[%s2 + $0x148] sm:$0xff] %v258
  %323 = vst [vmem:[%s2 + $0x150] sm:$0xff] %v259
  %324 = vst [vmem:[%s2 + $0x158] sm:$0xff] %v260
  %325 = vst [vmem:[%s2 + $0x160] sm:$0xff] %v261
  %326 = vst [vmem:[%s2 + $0x168] sm:$0xff] %v262
  %327 = vst [vmem:[%s2 + $0x170] sm:$0xff] %v263
  %328 = vst [vmem:[%s2 + $0x178] sm:$0xff] %v264
  %329 = vst [vmem:[%s2 + $0x180] sm:$0xff] %v265
  %330 = vst [vmem:[%s2 + $0x188] sm:$0xff] %v266
  %331 = vst [vmem:[%s2 + $0x190] sm:$0xff] %v267
  %332 = vst [vmem:[%s2 + $0x198] sm:$0xff] %v268
  %333 = vst [vmem:[%s2 + $0x1a0] sm:$0xff] %v269
  %334 = vst [vmem:[%s2 + $0x1a8] sm:$0xff] %v270
  %335 = vst [vmem:[%s2 + $0x1b0] sm:$0xff] %v271
  %336 = vst [vmem:[%s2 + $0x1b8] sm:$0xff] %v272
  %337 = vst [vmem:[%s2 + $0x1c0] sm:$0xff] %v273
  %338 = vst [vmem:[%s2 + $0x1c8] sm:$0xff] %v274
  %339 = vst [vmem:[%s2 + $0x1d0] sm:$0xff] %v275
  %340 = vst [vmem:[%s2 + $0x1d8] sm:$0xff] %v276
  %341 = vst [vmem:[%s2 + $0x1e0] sm:$0xff] %v277
  %342 = vst [vmem:[%s2 + $0x1e8] sm:$0xff] %v278
  %343 = vst [vmem:[%s2 + $0x1f0] sm:$0xff] %v279
  %344 = vst [vmem:[%s2 + $0x1f8] sm:$0xff] %v280
  // Predicated region
  $region10: #{conv_module_forward.3} parent=0 // pred_check
    _
  $region11: #{conv_module_forward.3} parent=0 // pred_check_branch
    %346 = sbr.rel (0) target = $region13
  $region12: #{conv_module_forward.3} parent=0 // pred_region
    _
  $region13: #{conv_module_forward.3} parent=0 // pred_fallthru
    _
  // Predicated region
  $region14: #{conv_module_forward.3} parent=0 // pred_check
    _
  $region15: #{conv_module_forward.3} parent=0 // pred_check_branch
    %348 = sbr.rel (0) target = $region17
  $region16: #{conv_module_forward.3} parent=0 // pred_region
    _
  $region17: #{conv_module_forward.3} parent=0 // pred_fallthru
    _

// kernel: conv_module_forward.2
$region0: #{conv_module_forward.2}
  #allocation0 [shape = 'u32[]', space=smem, size = 0x4, offset = 0x4, fixed_abs, tag = 'smem constant byte address 0x4 - core index']
  #allocation1 [shape = 'u32[144,128]{1,0:T(1,128)}', space=vmem, size = 0x12000, scoped, tag = 'internal scratch']
  %s0 = inlined_call_operand.vmem [shape: f32[2,18,18,4], index: 0, kind: input, shape index: {}]
  %s1 = inlined_call_operand.vmem [shape: f32[128,128], index: 1, kind: input, shape index: {}]
  %s2 = inlined_call_operand.vmem [shape: f32[1,128], index: 2, kind: input, shape index: {}]
  %s3 = inlined_call_operand.vmem [shape: f32[2,256,128], index: 3, kind: output, shape index: {0}]
  %s4 = inlined_call_operand.vmem [shape: f32[2,2,128], index: 4, kind: output, shape index: {1}]
  %5 = xla_tuple %s3, %s4
  %s6 = sld [smem:[#allocation0]]
  $region53: #{conv_module_forward.2} parent=0
    _
  %s8 = ssub.s32 1, %s6
  %s9 = scalar_select 0, %s8, %s6
  loop: start=0, step=1, limit=4
  $region2: #{conv_module_forward.2} parent=0 // loop_pre_header
    _
  $region3: #{conv_module_forward.2} parent=0 // loop_header
    %s11 = sphi 0, %s15
    %p12 = scmp.ge.s32.totalorder %s11, 4
    %s18 = sphi 0, %s30
    %s19 = sphi 0, %s26
    %s20 = sphi 0, %s18
    %s21 = sphi 0, %s19
    %s22 = sphi 0, %s20
    %s23 = sphi 0, %s21
    %s33 = sphi 0, %s35
    %s36 = sphi 0, %s33
    %s37 = sphi 0, %s36
    %s53 = sphi 0, %s37
    %s57 = sphi 0, %s57
    %s59 = sphi 0, %s57
    %s60 = sphi 0, %s59
    %s74 = sphi 0, %s60
    %s78 = sphi 0, %s78
    %s80 = sphi 0, %s78
    %s81 = sphi 0, %s80
    %s95 = sphi 0, %s81
    %s103 = sphi 0, %s105
    %s106 = sphi 0, %s103
    %s107 = sphi 0, %s106
    %s123 = sphi 0, %s107
    %s131 = sphi 0, %s133
    %s134 = sphi 0, %s131
    %s135 = sphi 0, %s134
    %s151 = sphi 0, %s135
  $region4: #{conv_module_forward.2} parent=0 // loop_header_branch
    %14 = sbr.rel (%p12) target = $region8
  $region5: #{conv_module_forward.2} parent=0 // loop_body
    %s16 = ssub.s32 %s11, 1
    %s17 = ssub.s32 %s11, 2
    %s24 = sadd.s32 1, %s19
    %p25 = scmp.ge.s32.totalorder %s24, 1
    %s26 = scalar_select %p25, 0, %s24
    %s27 = sadd.s32 1, %s18
    %s28 = scalar_select %p25, %s27, %s18
    %p29 = scmp.ge.s32.totalorder %s28, 2
    %s30 = scalar_select %p29, 0, %s28
    %s31 = ssub.s32 %s18, %s30
    %p32 = scmp.eq.s32.totalorder %s31, 0
    %s34 = sadd.s32 %s33, 1
    %s35 = scalar_select %p32, %s33, %s34
    %p38 = pneg %p32
    %p39 = scmp.eq.s32.totalorder %s11, 1
    %p40 = por %p38, %p39
    %p41 = scmp.ne.s32.totalorder %s33, %s36
    %p42 = scmp.eq.s32.totalorder %s11, 0
    %p43 = por %p41, %p42
    %p44 = scmp.ne.s32.totalorder %s33, %s36
    %p45 = scmp.eq.s32.totalorder %s16, 1
    %p46 = por %p44, %p45
    %p47 = scmp.ne.s32.totalorder %s36, %s37
    %p48 = scmp.eq.s32.totalorder %s16, 0
    %p49 = por %p47, %p48
    %p50 = scmp.ne.s32.totalorder %s36, %s37
    %p51 = scmp.eq.s32.totalorder %s17, 1
    %p52 = por %p50, %p51
    %p54 = scmp.ne.s32.totalorder %s37, %s53
    %p55 = scmp.eq.s32.totalorder %s17, 0
    %p56 = por %p54, %p55
    %s58 = sadd.s32 %s57, 1
    %p61 = scmp.eq.s32.totalorder %s11, 1
    %p62 = scmp.ne.s32.totalorder %s57, %s59
    %p63 = scmp.eq.s32.totalorder %s11, 0
    %p64 = por %p62, %p63
    %p65 = scmp.ne.s32.totalorder %s57, %s59
    %p66 = scmp.eq.s32.totalorder %s16, 1
    %p67 = por %p65, %p66
    %p68 = scmp.ne.s32.totalorder %s59, %s60
    %p69 = scmp.eq.s32.totalorder %s16, 0
    %p70 = por %p68, %p69
    %p71 = scmp.ne.s32.totalorder %s59, %s60
    %p72 = scmp.eq.s32.totalorder %s17, 1
    %p73 = por %p71, %p72
    %p75 = scmp.ne.s32.totalorder %s60, %s74
    %p76 = scmp.eq.s32.totalorder %s17, 0
    %p77 = por %p75, %p76
    %s79 = sadd.s32 %s78, 1
    %p82 = scmp.eq.s32.totalorder %s11, 1
    %p83 = scmp.ne.s32.totalorder %s78, %s80
    %p84 = scmp.eq.s32.totalorder %s11, 0
    %p85 = por %p83, %p84
    %p86 = scmp.ne.s32.totalorder %s78, %s80
    %p87 = scmp.eq.s32.totalorder %s16, 1
    %p88 = por %p86, %p87
    %p89 = scmp.ne.s32.totalorder %s80, %s81
    %p90 = scmp.eq.s32.totalorder %s16, 0
    %p91 = por %p89, %p90
    %p92 = scmp.ne.s32.totalorder %s80, %s81
    %p93 = scmp.eq.s32.totalorder %s17, 1
    %p94 = por %p92, %p93
    %p96 = scmp.ne.s32.totalorder %s81, %s95
    %p97 = scmp.eq.s32.totalorder %s17, 0
    %p98 = por %p96, %p97
    %s99 = sadd.s32 %s18, %s19
    %s100 = sadd.s32 %s30, %s26
    %s101 = ssub.s32 %s99, %s100
    %p102 = scmp.eq.s32.totalorder %s101, 0
    %s104 = sadd.s32 %s103, 1
    %s105 = scalar_select %p102, %s103, %s104
    %p108 = pneg %p102
    %p109 = scmp.eq.s32.totalorder %s11, 1
    %p110 = por %p108, %p109
    %p111 = scmp.ne.s32.totalorder %s103, %s106
    %p112 = scmp.eq.s32.totalorder %s11, 0
    %p113 = por %p111, %p112
    %p114 = scmp.ne.s32.totalorder %s103, %s106
    %p115 = scmp.eq.s32.totalorder %s16, 1
    %p116 = por %p114, %p115
    %p117 = scmp.ne.s32.totalorder %s106, %s107
    %p118 = scmp.eq.s32.totalorder %s16, 0
    %p119 = por %p117, %p118
    %p120 = scmp.ne.s32.totalorder %s106, %s107
    %p121 = scmp.eq.s32.totalorder %s17, 1
    %p122 = por %p120, %p121
    %p124 = scmp.ne.s32.totalorder %s107, %s123
    %p125 = scmp.eq.s32.totalorder %s17, 0
    %p126 = por %p124, %p125
    %s127 = sadd.s32 %s18, %s19
    %s128 = sadd.s32 %s30, %s26
    %s129 = ssub.s32 %s127, %s128
    %p130 = scmp.eq.s32.totalorder %s129, 0
    %s132 = sadd.s32 %s131, 1
    %s133 = scalar_select %p130, %s131, %s132
    %p136 = pneg %p130
    %p137 = scmp.eq.s32.totalorder %s11, 1
    %p138 = por %p136, %p137
    %p139 = scmp.ne.s32.totalorder %s131, %s134
    %p140 = scmp.eq.s32.totalorder %s11, 0
    %p141 = por %p139, %p140
    %p142 = scmp.ne.s32.totalorder %s131, %s134
    %p143 = scmp.eq.s32.totalorder %s16, 1
    %p144 = por %p142, %p143
    %p145 = scmp.ne.s32.totalorder %s134, %s135
    %p146 = scmp.eq.s32.totalorder %s16, 0
    %p147 = por %p145, %p146
    %p148 = scmp.ne.s32.totalorder %s134, %s135
    %p149 = scmp.eq.s32.totalorder %s17, 1
    %p150 = por %p148, %p149
    %p152 = scmp.ne.s32.totalorder %s135, %s151
    %p153 = scmp.eq.s32.totalorder %s17, 0
    %p154 = por %p152, %p153
    %p155 = scmp.le.s32.totalorder 1, %s11
    %p156 = scmp.lt.s32.totalorder %s11, 3
    %p157 = pnand %p155, %p156
    %p158 = pneg %p157
    // Predicated region
    $region9: #{conv_module_forward.2} parent=5 // pred_check
      _
    $region10: #{conv_module_forward.2} parent=5 // pred_check_branch
      %160 = sbr.rel (%p157) target = $region12
    $region11: #{conv_module_forward.2} parent=5 // pred_region
      %s161 = ssub.s32 %s11, 1
      // Predicated region
      $region13: #{conv_module_forward.2} parent=11 // pred_check
        %p162 = pneg %p70
      $region14: #{conv_module_forward.2} parent=11 // pred_check_branch
        %164 = sbr.rel (%p162) target = $region16
      $region15: #{conv_module_forward.2} parent=11 // pred_region
        _
      $region16: #{conv_module_forward.2} parent=11 // pred_fallthru
        _
      // Predicated region
      $region17: #{conv_module_forward.2} parent=11 // pred_check
        %p165 = pneg %p91
      $region18: #{conv_module_forward.2} parent=11 // pred_check_branch
        %167 = sbr.rel (%p165) target = $region20
      $region19: #{conv_module_forward.2} parent=11 // pred_region
        _
      $region20: #{conv_module_forward.2} parent=11 // pred_fallthru
        _
    $region12: #{conv_module_forward.2} parent=5 // pred_fallthru
      _
    %p168 = scmp.lt.s32.totalorder %s11, 2
    // Predicated region
    $region21: #{conv_module_forward.2} parent=5 // pred_check
      %p169 = pneg %p168
    $region22: #{conv_module_forward.2} parent=5 // pred_check_branch
      %171 = sbr.rel (%p169) target = $region24
    $region23: #{conv_module_forward.2} parent=5 // pred_region
      // Predicated region
      $region25: #{conv_module_forward.2} parent=23 // pred_check
        %p172 = pneg %p43
      $region26: #{conv_module_forward.2} parent=23 // pred_check_branch
        %174 = sbr.rel (%p172) target = $region28
      $region27: #{conv_module_forward.2} parent=23 // pred_region
        %p175 = scmp.lt.s32.totalorder %s18, 1
        %s176 = scalar_select %p175, %s18, 1
        %s177 = smul.addr %s176, 54
        %s178 = smul.addr %s177, 8
        %s179 = scalar_lea.vmem %s0, %s178
      $region28: #{conv_module_forward.2} parent=23 // pred_fallthru
        _
    $region24: #{conv_module_forward.2} parent=5 // pred_fallthru
      _
    %p180 = scmp.le.s32.totalorder 1, %s11
    %p181 = scmp.lt.s32.totalorder %s11, 3
    %p182 = pnand %p180, %p181
    %p183 = pneg %p182
    // Predicated region
    $region29: #{conv_module_forward.2} parent=5 // pred_check
      _
    $region30: #{conv_module_forward.2} parent=5 // pred_check_branch
      %185 = sbr.rel (%p182) target = $region32
    $region31: #{conv_module_forward.2} parent=5 // pred_region
      %s186 = ssub.s32 %s11, 1
      %p187 = scmp.lt.s32.totalorder %s20, 1
      %s188 = scalar_select %p187, %s20, 1
      %s189 = smul.addr %s188, 54
      %s190 = smul.addr %s189, 8
      %s191 = scalar_lea.vmem %s0, %s190
      %p192 = pneg %p49
      %p193 = pneg %p46
      %p194 = pneg %p70
      %p195 = pneg %p67
      %p196 = pneg %p91
      %p197 = pneg %p88
      %p198 = pneg %p119
      %p199 = pneg %p116
      %s200 = sadd.s32 %s20, %s21
      %p201 = scmp.lt.s32.totalorder %s200, 1
      %s202 = scalar_select %p201, %s200, 1
      %s203 = smul.addr %s202, 32
      %s204 = smul.addr %s203, 8
      %s205 = scalar_lea.vmem %s3, %s204
      %p206 = pneg %p147
      %p207 = pneg %p144
      %s208 = sadd.s32 %s20, %s21
      %p209 = scmp.lt.s32.totalorder %s208, 1
      %s210 = scalar_select %p209, %s208, 1
      %s211 = smul.addr %s210, 2
      %s212 = scalar_lea.vmem %s4, %s211
      %p213 = scmp.lt.s32.totalorder %s20, 1
      %s214 = scalar_select %p213, %s20, 1
      %s215 = smul.addr %s214, 54
      %s216 = smul.addr %s215, 8
      %s217 = scalar_lea.vmem %s0, %s216
      %s218 = sadd.s32 %s20, %s21
      %p219 = scmp.lt.s32.totalorder %s218, 1
      %s220 = scalar_select %p219, %s218, 1
      %s221 = smul.addr %s220, 32
      %s222 = smul.addr %s221, 8
      %s223 = scalar_lea.vmem %s3, %s222
      %s224 = sadd.s32 %s20, %s21
      %s225 = sadd.s32 %s20, %s21
      %p226 = scmp.lt.s32.totalorder %s225, 1
      %s227 = scalar_select %p226, %s225, 1
      %s228 = smul.addr %s227, 2
      %s229 = scalar_lea.vmem %s4, %s228
      %s230 = sadd.s32 %s20, %s21
      %s231 = smul.u32 %s21, 16
      %s232 = smul.u32 %s231, 24
      %s233 = scalar_lea.vmem %s217, %s232
      %v234 = vld [vmem:[%s233] sm:$0xff]
      %v235 = vld [vmem:[%s233 + $0x8] sm:$0xff]
      %v236 = vld [vmem:[%s233 + $0x18] sm:$0xff]
      %v237 = vld [vmem:[%s233 + $0x20] sm:$0xff]
      %v238 = vld [vmem:[%s233 + $0x30] sm:$0xff]
      %v239 = vld [vmem:[%s233 + $0x38] sm:$0xff]
      %v240 = vld [vmem:[%s233 + $0x48] sm:$0xff]
      %v241 = vld [vmem:[%s233 + $0x50] sm:$0xff]
      %v242 = vld [vmem:[%s233 + $0x60] sm:$0xff]
      %v243 = vld [vmem:[%s233 + $0x68] sm:$0xff]
      %v244 = vld [vmem:[%s233 + $0x78] sm:$0xff]
      %v245 = vld [vmem:[%s233 + $0x80] sm:$0xff]
      %v246 = vld [vmem:[%s233 + $0x90] sm:$0xff]
      %v247 = vld [vmem:[%s233 + $0x98] sm:$0xff]
      %v248 = vld [vmem:[%s233 + $0xa8] sm:$0xff]
      %v249 = vld [vmem:[%s233 + $0xb0] sm:$0xff]
      %v250 = vld [vmem:[%s233 + $0xc0] sm:$0xff]
      %v251 = vld [vmem:[%s233 + $0xc8] sm:$0xff]
      %v252 = vld [vmem:[%s233 + $0xd8] sm:$0xff]
      %v253 = vld [vmem:[%s233 + $0xe0] sm:$0xff]
      %v254 = vld [vmem:[%s233 + $0xf0] sm:$0xff]
      %v255 = vld [vmem:[%s233 + $0xf8] sm:$0xff]
      %v256 = vld [vmem:[%s233 + $0x108] sm:$0xff]
      %v257 = vld [vmem:[%s233 + $0x110] sm:$0xff]
      %v258 = vld [vmem:[%s233 + $0x120] sm:$0xff]
      %v259 = vld [vmem:[%s233 + $0x128] sm:$0xff]
      %v260 = vld [vmem:[%s233 + $0x138] sm:$0xff]
      %v261 = vld [vmem:[%s233 + $0x140] sm:$0xff]
      %v262 = vld [vmem:[%s233 + $0x150] sm:$0xff]
      %v263 = vld [vmem:[%s233 + $0x158] sm:$0xff]
      %v264 = vld [vmem:[%s233 + $0x168] sm:$0xff]
      %v265 = vld [vmem:[%s233 + $0x170] sm:$0xff]
      %v266 = vld [vmem:[%s233 + $0x1] sm:$0xff]
      %v267 = vld [vmem:[%s233 + $0x9] sm:$0xff]
      %v268 = vld [vmem:[%s233 + $0x19] sm:$0xff]
      %v269 = vld [vmem:[%s233 + $0x21] sm:$0xff]
      %v270 = vld [vmem:[%s233 + $0x31] sm:$0xff]
      %v271 = vld [vmem:[%s233 + $0x39] sm:$0xff]
      %v272 = vld [vmem:[%s233 + $0x49] sm:$0xff]
      %v273 = vld [vmem:[%s233 + $0x51] sm:$0xff]
      %v274 = vld [vmem:[%s233 + $0x61] sm:$0xff]
      %v275 = vld [vmem:[%s233 + $0x69] sm:$0xff]
      %v276 = vld [vmem:[%s233 + $0x79] sm:$0xff]
      %v277 = vld [vmem:[%s233 + $0x81] sm:$0xff]
      %v278 = vld [vmem:[%s233 + $0x91] sm:$0xff]
      %v279 = vld [vmem:[%s233 + $0x99] sm:$0xff]
      %v280 = vld [vmem:[%s233 + $0xa9] sm:$0xff]
      %v281 = vld [vmem:[%s233 + $0xb1] sm:$0xff]
      %v282 = vld [vmem:[%s233 + $0xc1] sm:$0xff]
      %v283 = vld [vmem:[%s233 + $0xc9] sm:$0xff]
      %v284 = vld [vmem:[%s233 + $0xd9] sm:$0xff]
      %v285 = vld [vmem:[%s233 + $0xe1] sm:$0xff]
      %v286 = vld [vmem:[%s233 + $0xf1] sm:$0xff]
      %v287 = vld [vmem:[%s233 + $0xf9] sm:$0xff]
      %v288 = vld [vmem:[%s233 + $0x109] sm:$0xff]
      %v289 = vld [vmem:[%s233 + $0x111] sm:$0xff]
      %v290 = vld [vmem:[%s233 + $0x121] sm:$0xff]
      %v291 = vld [vmem:[%s233 + $0x129] sm:$0xff]
      %v292 = vld [vmem:[%s233 + $0x139] sm:$0xff]
      %v293 = vld [vmem:[%s233 + $0x141] sm:$0xff]
      %v294 = vld [vmem:[%s233 + $0x151] sm:$0xff]
      %v295 = vld [vmem:[%s233 + $0x159] sm:$0xff]
      %v296 = vld [vmem:[%s233 + $0x169] sm:$0xff]
      %v297 = vld [vmem:[%s233 + $0x171] sm:$0xff]
      %v298 = vld [vmem:[%s233 + $0x2] sm:$0xff]
      %v299 = vld [vmem:[%s233 + $0xa] sm:$0xff]
      %v300 = vld [vmem:[%s233 + $0x1a] sm:$0xff]
      %v301 = vld [vmem:[%s233 + $0x22] sm:$0xff]
      %v302 = vld [vmem:[%s233 + $0x32] sm:$0xff]
      %v303 = vld [vmem:[%s233 + $0x3a] sm:$0xff]
      %v304 = vld [vmem:[%s233 + $0x4a] sm:$0xff]
      %v305 = vld [vmem:[%s233 + $0x52] sm:$0xff]
      %v306 = vld [vmem:[%s233 + $0x62] sm:$0xff]
      %v307 = vld [vmem:[%s233 + $0x6a] sm:$0xff]
      %v308 = vld [vmem:[%s233 + $0x7a] sm:$0xff]
      %v309 = vld [vmem:[%s233 + $0x82] sm:$0xff]
      %v310 = vld [vmem:[%s233 + $0x92] sm:$0xff]
      %v311 = vld [vmem:[%s233 + $0x9a] sm:$0xff]
      %v312 = vld [vmem:[%s233 + $0xaa] sm:$0xff]
      %v313 = vld [vmem:[%s233 + $0xb2] sm:$0xff]
      %v314 = vld [vmem:[%s233 + $0xc2] sm:$0xff]
      %v315 = vld [vmem:[%s233 + $0xca] sm:$0xff]
      %v316 = vld [vmem:[%s233 + $0xda] sm:$0xff]
      %v317 = vld [vmem:[%s233 + $0xe2] sm:$0xff]
      %v318 = vld [vmem:[%s233 + $0xf2] sm:$0xff]
      %v319 = vld [vmem:[%s233 + $0xfa] sm:$0xff]
      %v320 = vld [vmem:[%s233 + $0x10a] sm:$0xff]
      %v321 = vld [vmem:[%s233 + $0x112] sm:$0xff]
      %v322 = vld [vmem:[%s233 + $0x122] sm:$0xff]
      %v323 = vld [vmem:[%s233 + $0x12a] sm:$0xff]
      %v324 = vld [vmem:[%s233 + $0x13a] sm:$0xff]
      %v325 = vld [vmem:[%s233 + $0x142] sm:$0xff]
      %v326 = vld [vmem:[%s233 + $0x152] sm:$0xff]
      %v327 = vld [vmem:[%s233 + $0x15a] sm:$0xff]
      %v328 = vld [vmem:[%s233 + $0x16a] sm:$0xff]
      %v329 = vld [vmem:[%s233 + $0x172] sm:$0xff]
      %s330 = sadd.s32 %s231, 1
      %s331 = smul.u32 %s330, 24
      %s332 = scalar_lea.vmem %s217, %s331
      %v333 = vld [vmem:[%s332] sm:$0xff]
      %v334 = vld [vmem:[%s332 + $0x8] sm:$0xff]
      %v335 = vld [vmem:[%s332 + $0x18] sm:$0xff]
      %v336 = vld [vmem:[%s332 + $0x20] sm:$0xff]
      %v337 = vld [vmem:[%s332 + $0x30] sm:$0xff]
      %v338 = vld [vmem:[%s332 + $0x38] sm:$0xff]
      %v339 = vld [vmem:[%s332 + $0x48] sm:$0xff]
      %v340 = vld [vmem:[%s332 + $0x50] sm:$0xff]
      %v341 = vld [vmem:[%s332 + $0x60] sm:$0xff]
      %v342 = vld [vmem:[%s332 + $0x68] sm:$0xff]
      %v343 = vld [vmem:[%s332 + $0x78] sm:$0xff]
      %v344 = vld [vmem:[%s332 + $0x80] sm:$0xff]
      %v345 = vld [vmem:[%s332 + $0x90] sm:$0xff]
      %v346 = vld [vmem:[%s332 + $0x98] sm:$0xff]
      %v347 = vld [vmem:[%s332 + $0xa8] sm:$0xff]
      %v348 = vld [vmem:[%s332 + $0xb0] sm:$0xff]
      %v349 = vld [vmem:[%s332 + $0xc0] sm:$0xff]
      %v350 = vld [vmem:[%s332 + $0xc8] sm:$0xff]
      %v351 = vld [vmem:[%s332 + $0xd8] sm:$0xff]
      %v352 = vld [vmem:[%s332 + $0xe0] sm:$0xff]
      %v353 = vld [vmem:[%s332 + $0xf0] sm:$0xff]
      %v354 = vld [vmem:[%s332 + $0xf8] sm:$0xff]
      %v355 = vld [vmem:[%s332 + $0x108] sm:$0xff]
      %v356 = vld [vmem:[%s332 + $0x110] sm:$0xff]
      %v357 = vld [vmem:[%s332 + $0x120] sm:$0xff]
      %v358 = vld [vmem:[%s332 + $0x128] sm:$0xff]
      %v359 = vld [vmem:[%s332 + $0x138] sm:$0xff]
      %v360 = vld [vmem:[%s332 + $0x140] sm:$0xff]
      %v361 = vld [vmem:[%s332 + $0x150] sm:$0xff]
      %v362 = vld [vmem:[%s332 + $0x158] sm:$0xff]
      %v363 = vld [vmem:[%s332 + $0x168] sm:$0xff]
      %v364 = vld [vmem:[%s332 + $0x170] sm:$0xff]
      %v365 = vld [vmem:[%s332 + $0x1] sm:$0xff]
      %v366 = vld [vmem:[%s332 + $0x9] sm:$0xff]
      %v367 = vld [vmem:[%s332 + $0x19] sm:$0xff]
      %v368 = vld [vmem:[%s332 + $0x21] sm:$0xff]
      %v369 = vld [vmem:[%s332 + $0x31] sm:$0xff]
      %v370 = vld [vmem:[%s332 + $0x39] sm:$0xff]
      %v371 = vld [vmem:[%s332 + $0x49] sm:$0xff]
      %v372 = vld [vmem:[%s332 + $0x51] sm:$0xff]
      %v373 = vld [vmem:[%s332 + $0x61] sm:$0xff]
      %v374 = vld [vmem:[%s332 + $0x69] sm:$0xff]
      %v375 = vld [vmem:[%s332 + $0x79] sm:$0xff]
      %v376 = vld [vmem:[%s332 + $0x81] sm:$0xff]
      %v377 = vld [vmem:[%s332 + $0x91] sm:$0xff]
      %v378 = vld [vmem:[%s332 + $0x99] sm:$0xff]
      %v379 = vld [vmem:[%s332 + $0xa9] sm:$0xff]
      %v380 = vld [vmem:[%s332 + $0xb1] sm:$0xff]
      %v381 = vld [vmem:[%s332 + $0xc1] sm:$0xff]
      %v382 = vld [vmem:[%s332 + $0xc9] sm:$0xff]
      %v383 = vld [vmem:[%s332 + $0xd9] sm:$0xff]
      %v384 = vld [vmem:[%s332 + $0xe1] sm:$0xff]
      %v385 = vld [vmem:[%s332 + $0xf1] sm:$0xff]
      %v386 = vld [vmem:[%s332 + $0xf9] sm:$0xff]
      %v387 = vld [vmem:[%s332 + $0x109] sm:$0xff]
      %v388 = vld [vmem:[%s332 + $0x111] sm:$0xff]
      %v389 = vld [vmem:[%s332 + $0x121] sm:$0xff]
      %v390 = vld [vmem:[%s332 + $0x129] sm:$0xff]
      %v391 = vld [vmem:[%s332 + $0x139] sm:$0xff]
      %v392 = vld [vmem:[%s332 + $0x141] sm:$0xff]
      %v393 = vld [vmem:[%s332 + $0x151] sm:$0xff]
      %v394 = vld [vmem:[%s332 + $0x159] sm:$0xff]
      %v395 = vld [vmem:[%s332 + $0x169] sm:$0xff]
      %v396 = vld [vmem:[%s332 + $0x171] sm:$0xff]
      %v397 = vld [vmem:[%s332 + $0x2] sm:$0xff]
      %v398 = vld [vmem:[%s332 + $0xa] sm:$0xff]
      %v399 = vld [vmem:[%s332 + $0x1a] sm:$0xff]
      %v400 = vld [vmem:[%s332 + $0x22] sm:$0xff]
      %v401 = vld [vmem:[%s332 + $0x32] sm:$0xff]
      %v402 = vld [vmem:[%s332 + $0x3a] sm:$0xff]
      %v403 = vld [vmem:[%s332 + $0x4a] sm:$0xff]
      %v404 = vld [vmem:[%s332 + $0x52] sm:$0xff]
      %v405 = vld [vmem:[%s332 + $0x62] sm:$0xff]
      %v406 = vld [vmem:[%s332 + $0x6a] sm:$0xff]
      %v407 = vld [vmem:[%s332 + $0x7a] sm:$0xff]
      %v408 = vld [vmem:[%s332 + $0x82] sm:$0xff]
      %v409 = vld [vmem:[%s332 + $0x92] sm:$0xff]
      %v410 = vld [vmem:[%s332 + $0x9a] sm:$0xff]
      %v411 = vld [vmem:[%s332 + $0xaa] sm:$0xff]
      %v412 = vld [vmem:[%s332 + $0xb2] sm:$0xff]
      %v413 = vld [vmem:[%s332 + $0xc2] sm:$0xff]
      %v414 = vld [vmem:[%s332 + $0xca] sm:$0xff]
      %v415 = vld [vmem:[%s332 + $0xda] sm:$0xff]
      %v416 = vld [vmem:[%s332 + $0xe2] sm:$0xff]
      %v417 = vld [vmem:[%s332 + $0xf2] sm:$0xff]
      %v418 = vld [vmem:[%s332 + $0xfa] sm:$0xff]
      %v419 = vld [vmem:[%s332 + $0x10a] sm:$0xff]
      %v420 = vld [vmem:[%s332 + $0x112] sm:$0xff]
      %v421 = vld [vmem:[%s332 + $0x122] sm:$0xff]
      %v422 = vld [vmem:[%s332 + $0x12a] sm:$0xff]
      %v423 = vld [vmem:[%s332 + $0x13a] sm:$0xff]
      %v424 = vld [vmem:[%s332 + $0x142] sm:$0xff]
      %v425 = vld [vmem:[%s332 + $0x152] sm:$0xff]
      %v426 = vld [vmem:[%s332 + $0x15a] sm:$0xff]
      %v427 = vld [vmem:[%s332 + $0x16a] sm:$0xff]
      %v428 = vld [vmem:[%s332 + $0x172] sm:$0xff]
      %s429 = sadd.s32 %s231, 2
      %s430 = smul.u32 %s429, 24
      %s431 = scalar_lea.vmem %s217, %s430
      %v432 = vld [vmem:[%s431] sm:$0xff]
      %v433 = vld [vmem:[%s431 + $0x8] sm:$0xff]
      %v434 = vld [vmem:[%s431 + $0x18] sm:$0xff]
      %v435 = vld [vmem:[%s431 + $0x20] sm:$0xff]
      %v436 = vld [vmem:[%s431 + $0x30] sm:$0xff]
      %v437 = vld [vmem:[%s431 + $0x38] sm:$0xff]
      %v438 = vld [vmem:[%s431 + $0x48] sm:$0xff]
      %v439 = vld [vmem:[%s431 + $0x50] sm:$0xff]
      %v440 = vld [vmem:[%s431 + $0x60] sm:$0xff]
      %v441 = vld [vmem:[%s431 + $0x68] sm:$0xff]
      %v442 = vld [vmem:[%s431 + $0x78] sm:$0xff]
      %v443 = vld [vmem:[%s431 + $0x80] sm:$0xff]
      %v444 = vld [vmem:[%s431 + $0x90] sm:$0xff]
      %v445 = vld [vmem:[%s431 + $0x98] sm:$0xff]
      %v446 = vld [vmem:[%s431 + $0xa8] sm:$0xff]
      %v447 = vld [vmem:[%s431 + $0xb0] sm:$0xff]
      %v448 = vld [vmem:[%s431 + $0xc0] sm:$0xff]
      %v449 = vld [vmem:[%s431 + $0xc8] sm:$0xff]
      %v450 = vld [vmem:[%s431 + $0xd8] sm:$0xff]
      %v451 = vld [vmem:[%s431 + $0xe0] sm:$0xff]
      %v452 = vld [vmem:[%s431 + $0xf0] sm:$0xff]
      %v453 = vld [vmem:[%s431 + $0xf8] sm:$0xff]
      %v454 = vld [vmem:[%s431 + $0x108] sm:$0xff]
      %v455 = vld [vmem:[%s431 + $0x110] sm:$0xff]
      %v456 = vld [vmem:[%s431 + $0x120] sm:$0xff]
      %v457 = vld [vmem:[%s431 + $0x128] sm:$0xff]
      %v458 = vld [vmem:[%s431 + $0x138] sm:$0xff]
      %v459 = vld [vmem:[%s431 + $0x140] sm:$0xff]
      %v460 = vld [vmem:[%s431 + $0x150] sm:$0xff]
      %v461 = vld [vmem:[%s431 + $0x158] sm:$0xff]
      %v462 = vld [vmem:[%s431 + $0x168] sm:$0xff]
      %v463 = vld [vmem:[%s431 + $0x170] sm:$0xff]
      %v464 = vld [vmem:[%s431 + $0x1] sm:$0xff]
      %v465 = vld [vmem:[%s431 + $0x9] sm:$0xff]
      %v466 = vld [vmem:[%s431 + $0x19] sm:$0xff]
      %v467 = vld [vmem:[%s431 + $0x21] sm:$0xff]
      %v468 = vld [vmem:[%s431 + $0x31] sm:$0xff]
      %v469 = vld [vmem:[%s431 + $0x39] sm:$0xff]
      %v470 = vld [vmem:[%s431 + $0x49] sm:$0xff]
      %v471 = vld [vmem:[%s431 + $0x51] sm:$0xff]
      %v472 = vld [vmem:[%s431 + $0x61] sm:$0xff]
      %v473 = vld [vmem:[%s431 + $0x69] sm:$0xff]
      %v474 = vld [vmem:[%s431 + $0x79] sm:$0xff]
      %v475 = vld [vmem:[%s431 + $0x81] sm:$0xff]
      %v476 = vld [vmem:[%s431 + $0x91] sm:$0xff]
      %v477 = vld [vmem:[%s431 + $0x99] sm:$0xff]
      %v478 = vld [vmem:[%s431 + $0xa9] sm:$0xff]
      %v479 = vld [vmem:[%s431 + $0xb1] sm:$0xff]
      %v480 = vld [vmem:[%s431 + $0xc1] sm:$0xff]
      %v481 = vld [vmem:[%s431 + $0xc9] sm:$0xff]
      %v482 = vld [vmem:[%s431 + $0xd9] sm:$0xff]
      %v483 = vld [vmem:[%s431 + $0xe1] sm:$0xff]
      %v484 = vld [vmem:[%s431 + $0xf1] sm:$0xff]
      %v485 = vld [vmem:[%s431 + $0xf9] sm:$0xff]
      %v486 = vld [vmem:[%s431 + $0x109] sm:$0xff]
      %v487 = vld [vmem:[%s431 + $0x111] sm:$0xff]
      %v488 = vld [vmem:[%s431 + $0x121] sm:$0xff]
      %v489 = vld [vmem:[%s431 + $0x129] sm:$0xff]
      %v490 = vld [vmem:[%s431 + $0x139] sm:$0xff]
      %v491 = vld [vmem:[%s431 + $0x141] sm:$0xff]
      %v492 = vld [vmem:[%s431 + $0x151] sm:$0xff]
      %v493 = vld [vmem:[%s431 + $0x159] sm:$0xff]
      %v494 = vld [vmem:[%s431 + $0x169] sm:$0xff]
      %v495 = vld [vmem:[%s431 + $0x171] sm:$0xff]
      %v496 = vld [vmem:[%s431 + $0x2] sm:$0xff]
      %v497 = vld [vmem:[%s431 + $0xa] sm:$0xff]
      %v498 = vld [vmem:[%s431 + $0x1a] sm:$0xff]
      %v499 = vld [vmem:[%s431 + $0x22] sm:$0xff]
      %v500 = vld [vmem:[%s431 + $0x32] sm:$0xff]
      %v501 = vld [vmem:[%s431 + $0x3a] sm:$0xff]
      %v502 = vld [vmem:[%s431 + $0x4a] sm:$0xff]
      %v503 = vld [vmem:[%s431 + $0x52] sm:$0xff]
      %v504 = vld [vmem:[%s431 + $0x62] sm:$0xff]
      %v505 = vld [vmem:[%s431 + $0x6a] sm:$0xff]
      %v506 = vld [vmem:[%s431 + $0x7a] sm:$0xff]
      %v507 = vld [vmem:[%s431 + $0x82] sm:$0xff]
      %v508 = vld [vmem:[%s431 + $0x92] sm:$0xff]
      %v509 = vld [vmem:[%s431 + $0x9a] sm:$0xff]
      %v510 = vld [vmem:[%s431 + $0xaa] sm:$0xff]
      %v511 = vld [vmem:[%s431 + $0xb2] sm:$0xff]
      %v512 = vld [vmem:[%s431 + $0xc2] sm:$0xff]
      %v513 = vld [vmem:[%s431 + $0xca] sm:$0xff]
      %v514 = vld [vmem:[%s431 + $0xda] sm:$0xff]
      %v515 = vld [vmem:[%s431 + $0xe2] sm:$0xff]
      %v516 = vld [vmem:[%s431 + $0xf2] sm:$0xff]
      %v517 = vld [vmem:[%s431 + $0xfa] sm:$0xff]
      %v518 = vld [vmem:[%s431 + $0x10a] sm:$0xff]
      %v519 = vld [vmem:[%s431 + $0x112] sm:$0xff]
      %v520 = vld [vmem:[%s431 + $0x122] sm:$0xff]
      %v521 = vld [vmem:[%s431 + $0x12a] sm:$0xff]
      %v522 = vld [vmem:[%s431 + $0x13a] sm:$0xff]
      %v523 = vld [vmem:[%s431 + $0x142] sm:$0xff]
      %v524 = vld [vmem:[%s431 + $0x152] sm:$0xff]
      %v525 = vld [vmem:[%s431 + $0x15a] sm:$0xff]
      %v526 = vld [vmem:[%s431 + $0x16a] sm:$0xff]
      %v527 = vld [vmem:[%s431 + $0x172] sm:$0xff]
      %560 = vrot.lane.b32.xlu0 %v266, 4
      %v561 = vpop.permute.xlu0 %560
      %562 = vrot.lane.b32.xlu0 %v267, 4
      %v563 = vpop.permute.xlu0 %562
      %564 = vrot.lane.b32.xlu0 %v268, 4
      %v565 = vpop.permute.xlu0 %564
      %566 = vrot.lane.b32.xlu0 %v269, 4
      %v567 = vpop.permute.xlu0 %566
      %568 = vrot.lane.b32.xlu0 %v270, 4
      %v569 = vpop.permute.xlu0 %568
      %570 = vrot.lane.b32.xlu0 %v271, 4
      %v571 = vpop.permute.xlu0 %570
      %572 = vrot.lane.b32.xlu0 %v272, 4
      %v573 = vpop.permute.xlu0 %572
      %574 = vrot.lane.b32.xlu0 %v273, 4
      %v575 = vpop.permute.xlu0 %574
      %576 = vrot.lane.b32.xlu0 %v274, 4
      %v577 = vpop.permute.xlu0 %576
      %578 = vrot.lane.b32.xlu0 %v275, 4
      %v579 = vpop.permute.xlu0 %578
      %580 = vrot.lane.b32.xlu0 %v276, 4
      %v581 = vpop.permute.xlu0 %580
      %582 = vrot.lane.b32.xlu0 %v277, 4
      %v583 = vpop.permute.xlu0 %582
      %584 = vrot.lane.b32.xlu0 %v278, 4
      %v585 = vpop.permute.xlu0 %584
      %586 = vrot.lane.b32.xlu0 %v279, 4
      %v587 = vpop.permute.xlu0 %586
      %588 = vrot.lane.b32.xlu0 %v280, 4
      %v589 = vpop.permute.xlu0 %588
      %590 = vrot.lane.b32.xlu0 %v281, 4
      %v591 = vpop.permute.xlu0 %590
      %592 = vrot.lane.b32.xlu0 %v282, 4
      %v593 = vpop.permute.xlu0 %592
      %594 = vrot.lane.b32.xlu0 %v283, 4
      %v595 = vpop.permute.xlu0 %594
      %596 = vrot.lane.b32.xlu0 %v284, 4
      %v597 = vpop.permute.xlu0 %596
      %598 = vrot.lane.b32.xlu0 %v285, 4
      %v599 = vpop.permute.xlu0 %598
      %600 = vrot.lane.b32.xlu0 %v286, 4
      %v601 = vpop.permute.xlu0 %600
      %602 = vrot.lane.b32.xlu0 %v287, 4
      %v603 = vpop.permute.xlu0 %602
      %604 = vrot.lane.b32.xlu0 %v288, 4
      %v605 = vpop.permute.xlu0 %604
      %606 = vrot.lane.b32.xlu0 %v289, 4
      %v607 = vpop.permute.xlu0 %606
      %608 = vrot.lane.b32.xlu0 %v290, 4
      %v609 = vpop.permute.xlu0 %608
      %610 = vrot.lane.b32.xlu0 %v291, 4
      %v611 = vpop.permute.xlu0 %610
      %612 = vrot.lane.b32.xlu0 %v292, 4
      %v613 = vpop.permute.xlu0 %612
      %614 = vrot.lane.b32.xlu0 %v293, 4
      %v615 = vpop.permute.xlu0 %614
      %616 = vrot.lane.b32.xlu0 %v294, 4
      %v617 = vpop.permute.xlu0 %616
      %618 = vrot.lane.b32.xlu0 %v295, 4
      %v619 = vpop.permute.xlu0 %618
      %620 = vrot.lane.b32.xlu0 %v296, 4
      %v621 = vpop.permute.xlu0 %620
      %622 = vrot.lane.b32.xlu0 %v297, 4
      %v623 = vpop.permute.xlu0 %622
      %688 = vrot.lane.b32.xlu0 %v298, 8
      %v689 = vpop.permute.xlu0 %688
      %690 = vrot.lane.b32.xlu0 %v299, 8
      %v691 = vpop.permute.xlu0 %690
      %692 = vrot.lane.b32.xlu0 %v300, 8
      %v693 = vpop.permute.xlu0 %692
      %694 = vrot.lane.b32.xlu0 %v301, 8
      %v695 = vpop.permute.xlu0 %694
      %696 = vrot.lane.b32.xlu0 %v302, 8
      %v697 = vpop.permute.xlu0 %696
      %698 = vrot.lane.b32.xlu0 %v303, 8
      %v699 = vpop.permute.xlu0 %698
      %700 = vrot.lane.b32.xlu0 %v304, 8
      %v701 = vpop.permute.xlu0 %700
      %702 = vrot.lane.b32.xlu0 %v305, 8
      %v703 = vpop.permute.xlu0 %702
      %704 = vrot.lane.b32.xlu0 %v306, 8
      %v705 = vpop.permute.xlu0 %704
      %706 = vrot.lane.b32.xlu0 %v307, 8
      %v707 = vpop.permute.xlu0 %706
      %708 = vrot.lane.b32.xlu0 %v308, 8
      %v709 = vpop.permute.xlu0 %708
      %710 = vrot.lane.b32.xlu0 %v309, 8
      %v711 = vpop.permute.xlu0 %710
      %712 = vrot.lane.b32.xlu0 %v310, 8
      %v713 = vpop.permute.xlu0 %712
      %714 = vrot.lane.b32.xlu0 %v311, 8
      %v715 = vpop.permute.xlu0 %714
      %716 = vrot.lane.b32.xlu0 %v312, 8
      %v717 = vpop.permute.xlu0 %716
      %718 = vrot.lane.b32.xlu0 %v313, 8
      %v719 = vpop.permute.xlu0 %718
      %720 = vrot.lane.b32.xlu0 %v314, 8
      %v721 = vpop.permute.xlu0 %720
      %722 = vrot.lane.b32.xlu0 %v315, 8
      %v723 = vpop.permute.xlu0 %722
      %724 = vrot.lane.b32.xlu0 %v316, 8
      %v725 = vpop.permute.xlu0 %724
      %726 = vrot.lane.b32.xlu0 %v317, 8
      %v727 = vpop.permute.xlu0 %726
      %728 = vrot.lane.b32.xlu0 %v318, 8
      %v729 = vpop.permute.xlu0 %728
      %730 = vrot.lane.b32.xlu0 %v319, 8
      %v731 = vpop.permute.xlu0 %730
      %732 = vrot.lane.b32.xlu0 %v320, 8
      %v733 = vpop.permute.xlu0 %732
      %734 = vrot.lane.b32.xlu0 %v321, 8
      %v735 = vpop.permute.xlu0 %734
      %736 = vrot.lane.b32.xlu0 %v322, 8
      %v737 = vpop.permute.xlu0 %736
      %738 = vrot.lane.b32.xlu0 %v323, 8
      %v739 = vpop.permute.xlu0 %738
      %740 = vrot.lane.b32.xlu0 %v324, 8
      %v741 = vpop.permute.xlu0 %740
      %742 = vrot.lane.b32.xlu0 %v325, 8
      %v743 = vpop.permute.xlu0 %742
      %744 = vrot.lane.b32.xlu0 %v326, 8
      %v745 = vpop.permute.xlu0 %744
      %746 = vrot.lane.b32.xlu0 %v327, 8
      %v747 = vpop.permute.xlu0 %746
      %748 = vrot.lane.b32.xlu0 %v328, 8
      %v749 = vpop.permute.xlu0 %748
      %750 = vrot.lane.b32.xlu0 %v329, 8
      %v751 = vpop.permute.xlu0 %750
      %816 = vrot.lane.b32.xlu0 %v333, 12
      %v817 = vpop.permute.xlu0 %816
      %818 = vrot.lane.b32.xlu0 %v334, 12
      %v819 = vpop.permute.xlu0 %818
      %820 = vrot.lane.b32.xlu0 %v335, 12
      %v821 = vpop.permute.xlu0 %820
      %822 = vrot.lane.b32.xlu0 %v336, 12
      %v823 = vpop.permute.xlu0 %822
      %824 = vrot.lane.b32.xlu0 %v337, 12
      %v825 = vpop.permute.xlu0 %824
      %826 = vrot.lane.b32.xlu0 %v338, 12
      %v827 = vpop.permute.xlu0 %826
      %828 = vrot.lane.b32.xlu0 %v339, 12
      %v829 = vpop.permute.xlu0 %828
      %830 = vrot.lane.b32.xlu0 %v340, 12
      %v831 = vpop.permute.xlu0 %830
      %832 = vrot.lane.b32.xlu0 %v341, 12
      %v833 = vpop.permute.xlu0 %832
      %834 = vrot.lane.b32.xlu0 %v342, 12
      %v835 = vpop.permute.xlu0 %834
      %836 = vrot.lane.b32.xlu0 %v343, 12
      %v837 = vpop.permute.xlu0 %836
      %838 = vrot.lane.b32.xlu0 %v344, 12
      %v839 = vpop.permute.xlu0 %838
      %840 = vrot.lane.b32.xlu0 %v345, 12
      %v841 = vpop.permute.xlu0 %840
      %842 = vrot.lane.b32.xlu0 %v346, 12
      %v843 = vpop.permute.xlu0 %842
      %844 = vrot.lane.b32.xlu0 %v347, 12
      %v845 = vpop.permute.xlu0 %844
      %846 = vrot.lane.b32.xlu0 %v348, 12
      %v847 = vpop.permute.xlu0 %846
      %848 = vrot.lane.b32.xlu0 %v349, 12
      %v849 = vpop.permute.xlu0 %848
      %850 = vrot.lane.b32.xlu0 %v350, 12
      %v851 = vpop.permute.xlu0 %850
      %852 = vrot.lane.b32.xlu0 %v351, 12
      %v853 = vpop.permute.xlu0 %852
      %854 = vrot.lane.b32.xlu0 %v352, 12
      %v855 = vpop.permute.xlu0 %854
      %856 = vrot.lane.b32.xlu0 %v353, 12
      %v857 = vpop.permute.xlu0 %856
      %858 = vrot.lane.b32.xlu0 %v354, 12
      %v859 = vpop.permute.xlu0 %858
      %860 = vrot.lane.b32.xlu0 %v355, 12
      %v861 = vpop.permute.xlu0 %860
      %862 = vrot.lane.b32.xlu0 %v356, 12
      %v863 = vpop.permute.xlu0 %862
      %864 = vrot.lane.b32.xlu0 %v357, 12
      %v865 = vpop.permute.xlu0 %864
      %866 = vrot.lane.b32.xlu0 %v358, 12
      %v867 = vpop.permute.xlu0 %866
      %868 = vrot.lane.b32.xlu0 %v359, 12
      %v869 = vpop.permute.xlu0 %868
      %870 = vrot.lane.b32.xlu0 %v360, 12
      %v871 = vpop.permute.xlu0 %870
      %872 = vrot.lane.b32.xlu0 %v361, 12
      %v873 = vpop.permute.xlu0 %872
      %874 = vrot.lane.b32.xlu0 %v362, 12
      %v875 = vpop.permute.xlu0 %874
      %876 = vrot.lane.b32.xlu0 %v363, 12
      %v877 = vpop.permute.xlu0 %876
      %878 = vrot.lane.b32.xlu0 %v364, 12
      %v879 = vpop.permute.xlu0 %878
      %944 = vrot.lane.b32.xlu0 %v365, 16
      %v945 = vpop.permute.xlu0 %944
      %946 = vrot.lane.b32.xlu0 %v366, 16
      %v947 = vpop.permute.xlu0 %946
      %948 = vrot.lane.b32.xlu0 %v367, 16
      %v949 = vpop.permute.xlu0 %948
      %950 = vrot.lane.b32.xlu0 %v368, 16
      %v951 = vpop.permute.xlu0 %950
      %952 = vrot.lane.b32.xlu0 %v369, 16
      %v953 = vpop.permute.xlu0 %952
      %954 = vrot.lane.b32.xlu0 %v370, 16
      %v955 = vpop.permute.xlu0 %954
      %956 = vrot.lane.b32.xlu0 %v371, 16
      %v957 = vpop.permute.xlu0 %956
      %958 = vrot.lane.b32.xlu0 %v372, 16
      %v959 = vpop.permute.xlu0 %958
      %960 = vrot.lane.b32.xlu0 %v373, 16
      %v961 = vpop.permute.xlu0 %960
      %962 = vrot.lane.b32.xlu0 %v374, 16
      %v963 = vpop.permute.xlu0 %962
      %964 = vrot.lane.b32.xlu0 %v375, 16
      %v965 = vpop.permute.xlu0 %964
      %966 = vrot.lane.b32.xlu0 %v376, 16
      %v967 = vpop.permute.xlu0 %966
      %968 = vrot.lane.b32.xlu0 %v377, 16
      %v969 = vpop.permute.xlu0 %968
      %970 = vrot.lane.b32.xlu0 %v378, 16
      %v971 = vpop.permute.xlu0 %970
      %972 = vrot.lane.b32.xlu0 %v379, 16
      %v973 = vpop.permute.xlu0 %972
      %974 = vrot.lane.b32.xlu0 %v380, 16
      %v975 = vpop.permute.xlu0 %974
      %976 = vrot.lane.b32.xlu0 %v381, 16
      %v977 = vpop.permute.xlu0 %976
      %978 = vrot.lane.b32.xlu0 %v382, 16
      %v979 = vpop.permute.xlu0 %978
      %980 = vrot.lane.b32.xlu0 %v383, 16
      %v981 = vpop.permute.xlu0 %980
      %982 = vrot.lane.b32.xlu0 %v384, 16
      %v983 = vpop.permute.xlu0 %982
      %984 = vrot.lane.b32.xlu0 %v385, 16
      %v985 = vpop.permute.xlu0 %984
      %986 = vrot.lane.b32.xlu0 %v386, 16
      %v987 = vpop.permute.xlu0 %986
      %988 = vrot.lane.b32.xlu0 %v387, 16
      %v989 = vpop.permute.xlu0 %988
      %990 = vrot.lane.b32.xlu0 %v388, 16
      %v991 = vpop.permute.xlu0 %990
      %992 = vrot.lane.b32.xlu0 %v389, 16
      %v993 = vpop.permute.xlu0 %992
      %994 = vrot.lane.b32.xlu0 %v390, 16
      %v995 = vpop.permute.xlu0 %994
      %996 = vrot.lane.b32.xlu0 %v391, 16
      %v997 = vpop.permute.xlu0 %996
      %998 = vrot.lane.b32.xlu0 %v392, 16
      %v999 = vpop.permute.xlu0 %998
      %1000 = vrot.lane.b32.xlu0 %v393, 16
      %v1001 = vpop.permute.xlu0 %1000
      %1002 = vrot.lane.b32.xlu0 %v394, 16
      %v1003 = vpop.permute.xlu0 %1002
      %1004 = vrot.lane.b32.xlu0 %v395, 16
      %v1005 = vpop.permute.xlu0 %1004
      %1006 = vrot.lane.b32.xlu0 %v396, 16
      %v1007 = vpop.permute.xlu0 %1006
      %1072 = vrot.lane.b32.xlu0 %v397, 20
      %v1073 = vpop.permute.xlu0 %1072
      %1074 = vrot.lane.b32.xlu0 %v398, 20
      %v1075 = vpop.permute.xlu0 %1074
      %1076 = vrot.lane.b32.xlu0 %v399, 20
      %v1077 = vpop.permute.xlu0 %1076
      %1078 = vrot.lane.b32.xlu0 %v400, 20
      %v1079 = vpop.permute.xlu0 %1078
      %1080 = vrot.lane.b32.xlu0 %v401, 20
      %v1081 = vpop.permute.xlu0 %1080
      %1082 = vrot.lane.b32.xlu0 %v402, 20
      %v1083 = vpop.permute.xlu0 %1082
      %1084 = vrot.lane.b32.xlu0 %v403, 20
      %v1085 = vpop.permute.xlu0 %1084
      %1086 = vrot.lane.b32.xlu0 %v404, 20
      %v1087 = vpop.permute.xlu0 %1086
      %1088 = vrot.lane.b32.xlu0 %v405, 20
      %v1089 = vpop.permute.xlu0 %1088
      %1090 = vrot.lane.b32.xlu0 %v406, 20
      %v1091 = vpop.permute.xlu0 %1090
      %1092 = vrot.lane.b32.xlu0 %v407, 20
      %v1093 = vpop.permute.xlu0 %1092
      %1094 = vrot.lane.b32.xlu0 %v408, 20
      %v1095 = vpop.permute.xlu0 %1094
      %1096 = vrot.lane.b32.xlu0 %v409, 20
      %v1097 = vpop.permute.xlu0 %1096
      %1098 = vrot.lane.b32.xlu0 %v410, 20
      %v1099 = vpop.permute.xlu0 %1098
      %1100 = vrot.lane.b32.xlu0 %v411, 20
      %v1101 = vpop.permute.xlu0 %1100
      %1102 = vrot.lane.b32.xlu0 %v412, 20
      %v1103 = vpop.permute.xlu0 %1102
      %1104 = vrot.lane.b32.xlu0 %v413, 20
      %v1105 = vpop.permute.xlu0 %1104
      %1106 = vrot.lane.b32.xlu0 %v414, 20
      %v1107 = vpop.permute.xlu0 %1106
      %1108 = vrot.lane.b32.xlu0 %v415, 20
      %v1109 = vpop.permute.xlu0 %1108
      %1110 = vrot.lane.b32.xlu0 %v416, 20
      %v1111 = vpop.permute.xlu0 %1110
      %1112 = vrot.lane.b32.xlu0 %v417, 20
      %v1113 = vpop.permute.xlu0 %1112
      %1114 = vrot.lane.b32.xlu0 %v418, 20
      %v1115 = vpop.permute.xlu0 %1114
      %1116 = vrot.lane.b32.xlu0 %v419, 20
      %v1117 = vpop.permute.xlu0 %1116
      %1118 = vrot.lane.b32.xlu0 %v420, 20
      %v1119 = vpop.permute.xlu0 %1118
      %1120 = vrot.lane.b32.xlu0 %v421, 20
      %v1121 = vpop.permute.xlu0 %1120
      %1122 = vrot.lane.b32.xlu0 %v422, 20
      %v1123 = vpop.permute.xlu0 %1122
      %1124 = vrot.lane.b32.xlu0 %v423, 20
      %v1125 = vpop.permute.xlu0 %1124
      %1126 = vrot.lane.b32.xlu0 %v424, 20
      %v1127 = vpop.permute.xlu0 %1126
      %1128 = vrot.lane.b32.xlu0 %v425, 20
      %v1129 = vpop.permute.xlu0 %1128
      %1130 = vrot.lane.b32.xlu0 %v426, 20
      %v1131 = vpop.permute.xlu0 %1130
      %1132 = vrot.lane.b32.xlu0 %v427, 20
      %v1133 = vpop.permute.xlu0 %1132
      %1134 = vrot.lane.b32.xlu0 %v428, 20
      %v1135 = vpop.permute.xlu0 %1134
      %1200 = vrot.lane.b32.xlu0 %v432, 24
      %v1201 = vpop.permute.xlu0 %1200
      %1202 = vrot.lane.b32.xlu0 %v433, 24
      %v1203 = vpop.permute.xlu0 %1202
      %1204 = vrot.lane.b32.xlu0 %v434, 24
      %v1205 = vpop.permute.xlu0 %1204
      %1206 = vrot.lane.b32.xlu0 %v435, 24
      %v1207 = vpop.permute.xlu0 %1206
      %1208 = vrot.lane.b32.xlu0 %v436, 24
      %v1209 = vpop.permute.xlu0 %1208
      %1210 = vrot.lane.b32.xlu0 %v437, 24
      %v1211 = vpop.permute.xlu0 %1210
      %1212 = vrot.lane.b32.xlu0 %v438, 24
      %v1213 = vpop.permute.xlu0 %1212
      %1214 = vrot.lane.b32.xlu0 %v439, 24
      %v1215 = vpop.permute.xlu0 %1214
      %1216 = vrot.lane.b32.xlu0 %v440, 24
      %v1217 = vpop.permute.xlu0 %1216
      %1218 = vrot.lane.b32.xlu0 %v441, 24
      %v1219 = vpop.permute.xlu0 %1218
      %1220 = vrot.lane.b32.xlu0 %v442, 24
      %v1221 = vpop.permute.xlu0 %1220
      %1222 = vrot.lane.b32.xlu0 %v443, 24
      %v1223 = vpop.permute.xlu0 %1222
      %1224 = vrot.lane.b32.xlu0 %v444, 24
      %v1225 = vpop.permute.xlu0 %1224
      %1226 = vrot.lane.b32.xlu0 %v445, 24
      %v1227 = vpop.permute.xlu0 %1226
      %1228 = vrot.lane.b32.xlu0 %v446, 24
      %v1229 = vpop.permute.xlu0 %1228
      %1230 = vrot.lane.b32.xlu0 %v447, 24
      %v1231 = vpop.permute.xlu0 %1230
      %1232 = vrot.lane.b32.xlu0 %v448, 24
      %v1233 = vpop.permute.xlu0 %1232
      %1234 = vrot.lane.b32.xlu0 %v449, 24
      %v1235 = vpop.permute.xlu0 %1234
      %1236 = vrot.lane.b32.xlu0 %v450, 24
      %v1237 = vpop.permute.xlu0 %1236
      %1238 = vrot.lane.b32.xlu0 %v451, 24
      %v1239 = vpop.permute.xlu0 %1238
      %1240 = vrot.lane.b32.xlu0 %v452, 24
      %v1241 = vpop.permute.xlu0 %1240
      %1242 = vrot.lane.b32.xlu0 %v453, 24
      %v1243 = vpop.permute.xlu0 %1242
      %1244 = vrot.lane.b32.xlu0 %v454, 24
      %v1245 = vpop.permute.xlu0 %1244
      %1246 = vrot.lane.b32.xlu0 %v455, 24
      %v1247 = vpop.permute.xlu0 %1246
      %1248 = vrot.lane.b32.xlu0 %v456, 24
      %v1249 = vpop.permute.xlu0 %1248
      %1250 = vrot.lane.b32.xlu0 %v457, 24
      %v1251 = vpop.permute.xlu0 %1250
      %1252 = vrot.lane.b32.xlu0 %v458, 24
      %v1253 = vpop.permute.xlu0 %1252
      %1254 = vrot.lane.b32.xlu0 %v459, 24
      %v1255 = vpop.permute.xlu0 %1254
      %1256 = vrot.lane.b32.xlu0 %v460, 24
      %v1257 = vpop.permute.xlu0 %1256
      %1258 = vrot.lane.b32.xlu0 %v461, 24
      %v1259 = vpop.permute.xlu0 %1258
      %1260 = vrot.lane.b32.xlu0 %v462, 24
      %v1261 = vpop.permute.xlu0 %1260
      %1262 = vrot.lane.b32.xlu0 %v463, 24
      %v1263 = vpop.permute.xlu0 %1262
      %1328 = vrot.lane.b32.xlu0 %v464, 28
      %v1329 = vpop.permute.xlu0 %1328
      %1330 = vrot.lane.b32.xlu0 %v465, 28
      %v1331 = vpop.permute.xlu0 %1330
      %1332 = vrot.lane.b32.xlu0 %v466, 28
      %v1333 = vpop.permute.xlu0 %1332
      %1334 = vrot.lane.b32.xlu0 %v467, 28
      %v1335 = vpop.permute.xlu0 %1334
      %1336 = vrot.lane.b32.xlu0 %v468, 28
      %v1337 = vpop.permute.xlu0 %1336
      %1338 = vrot.lane.b32.xlu0 %v469, 28
      %v1339 = vpop.permute.xlu0 %1338
      %1340 = vrot.lane.b32.xlu0 %v470, 28
      %v1341 = vpop.permute.xlu0 %1340
      %1342 = vrot.lane.b32.xlu0 %v471, 28
      %v1343 = vpop.permute.xlu0 %1342
      %1344 = vrot.lane.b32.xlu0 %v472, 28
      %v1345 = vpop.permute.xlu0 %1344
      %1346 = vrot.lane.b32.xlu0 %v473, 28
      %v1347 = vpop.permute.xlu0 %1346
      %1348 = vrot.lane.b32.xlu0 %v474, 28
      %v1349 = vpop.permute.xlu0 %1348
      %1350 = vrot.lane.b32.xlu0 %v475, 28
      %v1351 = vpop.permute.xlu0 %1350
      %1352 = vrot.lane.b32.xlu0 %v476, 28
      %v1353 = vpop.permute.xlu0 %1352
      %1354 = vrot.lane.b32.xlu0 %v477, 28
      %v1355 = vpop.permute.xlu0 %1354
      %1356 = vrot.lane.b32.xlu0 %v478, 28
      %v1357 = vpop.permute.xlu0 %1356
      %1358 = vrot.lane.b32.xlu0 %v479, 28
      %v1359 = vpop.permute.xlu0 %1358
      %1360 = vrot.lane.b32.xlu0 %v480, 28
      %v1361 = vpop.permute.xlu0 %1360
      %1362 = vrot.lane.b32.xlu0 %v481, 28
      %v1363 = vpop.permute.xlu0 %1362
      %1364 = vrot.lane.b32.xlu0 %v482, 28
      %v1365 = vpop.permute.xlu0 %1364
      %1366 = vrot.lane.b32.xlu0 %v483, 28
      %v1367 = vpop.permute.xlu0 %1366
      %1368 = vrot.lane.b32.xlu0 %v484, 28
      %v1369 = vpop.permute.xlu0 %1368
      %1370 = vrot.lane.b32.xlu0 %v485, 28
      %v1371 = vpop.permute.xlu0 %1370
      %1372 = vrot.lane.b32.xlu0 %v486, 28
      %v1373 = vpop.permute.xlu0 %1372
      %1374 = vrot.lane.b32.xlu0 %v487, 28
      %v1375 = vpop.permute.xlu0 %1374
      %1376 = vrot.lane.b32.xlu0 %v488, 28
      %v1377 = vpop.permute.xlu0 %1376
      %1378 = vrot.lane.b32.xlu0 %v489, 28
      %v1379 = vpop.permute.xlu0 %1378
      %1380 = vrot.lane.b32.xlu0 %v490, 28
      %v1381 = vpop.permute.xlu0 %1380
      %1382 = vrot.lane.b32.xlu0 %v491, 28
      %v1383 = vpop.permute.xlu0 %1382
      %1384 = vrot.lane.b32.xlu0 %v492, 28
      %v1385 = vpop.permute.xlu0 %1384
      %1386 = vrot.lane.b32.xlu0 %v493, 28
      %v1387 = vpop.permute.xlu0 %1386
      %1388 = vrot.lane.b32.xlu0 %v494, 28
      %v1389 = vpop.permute.xlu0 %1388
      %1390 = vrot.lane.b32.xlu0 %v495, 28
      %v1391 = vpop.permute.xlu0 %1390
      %1456 = vrot.lane.b32.xlu0 %v496, 32
      %v1457 = vpop.permute.xlu0 %1456
      %1458 = vrot.lane.b32.xlu0 %v497, 32
      %v1459 = vpop.permute.xlu0 %1458
      %1460 = vrot.lane.b32.xlu0 %v498, 32
      %v1461 = vpop.permute.xlu0 %1460
      %1462 = vrot.lane.b32.xlu0 %v499, 32
      %v1463 = vpop.permute.xlu0 %1462
      %1464 = vrot.lane.b32.xlu0 %v500, 32
      %v1465 = vpop.permute.xlu0 %1464
      %1466 = vrot.lane.b32.xlu0 %v501, 32
      %v1467 = vpop.permute.xlu0 %1466
      %1468 = vrot.lane.b32.xlu0 %v502, 32
      %v1469 = vpop.permute.xlu0 %1468
      %1470 = vrot.lane.b32.xlu0 %v503, 32
      %v1471 = vpop.permute.xlu0 %1470
      %1472 = vrot.lane.b32.xlu0 %v504, 32
      %v1473 = vpop.permute.xlu0 %1472
      %1474 = vrot.lane.b32.xlu0 %v505, 32
      %v1475 = vpop.permute.xlu0 %1474
      %1476 = vrot.lane.b32.xlu0 %v506, 32
      %v1477 = vpop.permute.xlu0 %1476
      %1478 = vrot.lane.b32.xlu0 %v507, 32
      %v1479 = vpop.permute.xlu0 %1478
      %1480 = vrot.lane.b32.xlu0 %v508, 32
      %v1481 = vpop.permute.xlu0 %1480
      %1482 = vrot.lane.b32.xlu0 %v509, 32
      %v1483 = vpop.permute.xlu0 %1482
      %1484 = vrot.lane.b32.xlu0 %v510, 32
      %v1485 = vpop.permute.xlu0 %1484
      %1486 = vrot.lane.b32.xlu0 %v511, 32
      %v1487 = vpop.permute.xlu0 %1486
      %1488 = vrot.lane.b32.xlu0 %v512, 32
      %v1489 = vpop.permute.xlu0 %1488
      %1490 = vrot.lane.b32.xlu0 %v513, 32
      %v1491 = vpop.permute.xlu0 %1490
      %1492 = vrot.lane.b32.xlu0 %v514, 32
      %v1493 = vpop.permute.xlu0 %1492
      %1494 = vrot.lane.b32.xlu0 %v515, 32
      %v1495 = vpop.permute.xlu0 %1494
      %1496 = vrot.lane.b32.xlu0 %v516, 32
      %v1497 = vpop.permute.xlu0 %1496
      %1498 = vrot.lane.b32.xlu0 %v517, 32
      %v1499 = vpop.permute.xlu0 %1498
      %1500 = vrot.lane.b32.xlu0 %v518, 32
      %v1501 = vpop.permute.xlu0 %1500
      %1502 = vrot.lane.b32.xlu0 %v519, 32
      %v1503 = vpop.permute.xlu0 %1502
      %1504 = vrot.lane.b32.xlu0 %v520, 32
      %v1505 = vpop.permute.xlu0 %1504
      %1506 = vrot.lane.b32.xlu0 %v521, 32
      %v1507 = vpop.permute.xlu0 %1506
      %1508 = vrot.lane.b32.xlu0 %v522, 32
      %v1509 = vpop.permute.xlu0 %1508
      %1510 = vrot.lane.b32.xlu0 %v523, 32
      %v1511 = vpop.permute.xlu0 %1510
      %1512 = vrot.lane.b32.xlu0 %v524, 32
      %v1513 = vpop.permute.xlu0 %1512
      %1514 = vrot.lane.b32.xlu0 %v525, 32
      %v1515 = vpop.permute.xlu0 %1514
      %1516 = vrot.lane.b32.xlu0 %v526, 32
      %v1517 = vpop.permute.xlu0 %1516
      %1518 = vrot.lane.b32.xlu0 %v527, 32
      %v1519 = vpop.permute.xlu0 %1518
      %vm1552 = vcmask 31744
      %v1553 = vsel %vm1552, %v234, %v561
      %v1554 = vsel %vm1552, %v235, %v563
      %v1555 = vsel %vm1552, %v236, %v565
      %v1556 = vsel %vm1552, %v237, %v567
      %v1557 = vsel %vm1552, %v238, %v569
      %v1558 = vsel %vm1552, %v239, %v571
      %v1559 = vsel %vm1552, %v240, %v573
      %v1560 = vsel %vm1552, %v241, %v575
      %v1561 = vsel %vm1552, %v242, %v577
      %v1562 = vsel %vm1552, %v243, %v579
      %v1563 = vsel %vm1552, %v244, %v581
      %v1564 = vsel %vm1552, %v245, %v583
      %v1565 = vsel %vm1552, %v246, %v585
      %v1566 = vsel %vm1552, %v247, %v587
      %v1567 = vsel %vm1552, %v248, %v589
      %v1568 = vsel %vm1552, %v249, %v591
      %v1569 = vsel %vm1552, %v250, %v593
      %v1570 = vsel %vm1552, %v251, %v595
      %v1571 = vsel %vm1552, %v252, %v597
      %v1572 = vsel %vm1552, %v253, %v599
      %v1573 = vsel %vm1552, %v254, %v601
      %v1574 = vsel %vm1552, %v255, %v603
      %v1575 = vsel %vm1552, %v256, %v605
      %v1576 = vsel %vm1552, %v257, %v607
      %v1577 = vsel %vm1552, %v258, %v609
      %v1578 = vsel %vm1552, %v259, %v611
      %v1579 = vsel %vm1552, %v260, %v613
      %v1580 = vsel %vm1552, %v261, %v615
      %v1581 = vsel %vm1552, %v262, %v617
      %v1582 = vsel %vm1552, %v263, %v619
      %v1583 = vsel %vm1552, %v264, %v621
      %v1584 = vsel %vm1552, %v265, %v623
      %vm1585 = vcmask 64512
      %v1586 = vsel %vm1585, %v1553, %v689
      %v1587 = vsel %vm1585, %v1554, %v691
      %v1588 = vsel %vm1585, %v1555, %v693
      %v1589 = vsel %vm1585, %v1556, %v695
      %v1590 = vsel %vm1585, %v1557, %v697
      %v1591 = vsel %vm1585, %v1558, %v699
      %v1592 = vsel %vm1585, %v1559, %v701
      %v1593 = vsel %vm1585, %v1560, %v703
      %v1594 = vsel %vm1585, %v1561, %v705
      %v1595 = vsel %vm1585, %v1562, %v707
      %v1596 = vsel %vm1585, %v1563, %v709
      %v1597 = vsel %vm1585, %v1564, %v711
      %v1598 = vsel %vm1585, %v1565, %v713
      %v1599 = vsel %vm1585, %v1566, %v715
      %v1600 = vsel %vm1585, %v1567, %v717
      %v1601 = vsel %vm1585, %v1568, %v719
      %v1602 = vsel %vm1585, %v1569, %v721
      %v1603 = vsel %vm1585, %v1570, %v723
      %v1604 = vsel %vm1585, %v1571, %v725
      %v1605 = vsel %vm1585, %v1572, %v727
      %v1606 = vsel %vm1585, %v1573, %v729
      %v1607 = vsel %vm1585, %v1574, %v731
      %v1608 = vsel %vm1585, %v1575, %v733
      %v1609 = vsel %vm1585, %v1576, %v735
      %v1610 = vsel %vm1585, %v1577, %v737
      %v1611 = vsel %vm1585, %v1578, %v739
      %v1612 = vsel %vm1585, %v1579, %v741
      %v1613 = vsel %vm1585, %v1580, %v743
      %v1614 = vsel %vm1585, %v1581, %v745
      %v1615 = vsel %vm1585, %v1582, %v747
      %v1616 = vsel %vm1585, %v1583, %v749
      %v1617 = vsel %vm1585, %v1584, %v751
      %vm1618 = vcmask 97280
      %v1619 = vsel %vm1618, %v1586, %v817
      %v1620 = vsel %vm1618, %v1587, %v819
      %v1621 = vsel %vm1618, %v1588, %v821
      %v1622 = vsel %vm1618, %v1589, %v823
      %v1623 = vsel %vm1618, %v1590, %v825
      %v1624 = vsel %vm1618, %v1591, %v827
      %v1625 = vsel %vm1618, %v1592, %v829
      %v1626 = vsel %vm1618, %v1593, %v831
      %v1627 = vsel %vm1618, %v1594, %v833
      %v1628 = vsel %vm1618, %v1595, %v835
      %v1629 = vsel %vm1618, %v1596, %v837
      %v1630 = vsel %vm1618, %v1597, %v839
      %v1631 = vsel %vm1618, %v1598, %v841
      %v1632 = vsel %vm1618, %v1599, %v843
      %v1633 = vsel %vm1618, %v1600, %v845
      %v1634 = vsel %vm1618, %v1601, %v847
      %v1635 = vsel %vm1618, %v1602, %v849
      %v1636 = vsel %vm1618, %v1603, %v851
      %v1637 = vsel %vm1618, %v1604, %v853
      %v1638 = vsel %vm1618, %v1605, %v855
      %v1639 = vsel %vm1618, %v1606, %v857
      %v1640 = vsel %vm1618, %v1607, %v859
      %v1641 = vsel %vm1618, %v1608, %v861
      %v1642 = vsel %vm1618, %v1609, %v863
      %v1643 = vsel %vm1618, %v1610, %v865
      %v1644 = vsel %vm1618, %v1611, %v867
      %v1645 = vsel %vm1618, %v1612, %v869
      %v1646 = vsel %vm1618, %v1613, %v871
      %v1647 = vsel %vm1618, %v1614, %v873
      %v1648 = vsel %vm1618, %v1615, %v875
      %v1649 = vsel %vm1618, %v1616, %v877
      %v1650 = vsel %vm1618, %v1617, %v879
      %vm1651 = vcmask 130048
      %v1652 = vsel %vm1651, %v1619, %v945
      %v1653 = vsel %vm1651, %v1620, %v947
      %v1654 = vsel %vm1651, %v1621, %v949
      %v1655 = vsel %vm1651, %v1622, %v951
      %v1656 = vsel %vm1651, %v1623, %v953
      %v1657 = vsel %vm1651, %v1624, %v955
      %v1658 = vsel %vm1651, %v1625, %v957
      %v1659 = vsel %vm1651, %v1626, %v959
      %v1660 = vsel %vm1651, %v1627, %v961
      %v1661 = vsel %vm1651, %v1628, %v963
      %v1662 = vsel %vm1651, %v1629, %v965
      %v1663 = vsel %vm1651, %v1630, %v967
      %v1664 = vsel %vm1651, %v1631, %v969
      %v1665 = vsel %vm1651, %v1632, %v971
      %v1666 = vsel %vm1651, %v1633, %v973
      %v1667 = vsel %vm1651, %v1634, %v975
      %v1668 = vsel %vm1651, %v1635, %v977
      %v1669 = vsel %vm1651, %v1636, %v979
      %v1670 = vsel %vm1651, %v1637, %v981
      %v1671 = vsel %vm1651, %v1638, %v983
      %v1672 = vsel %vm1651, %v1639, %v985
      %v1673 = vsel %vm1651, %v1640, %v987
      %v1674 = vsel %vm1651, %v1641, %v989
      %v1675 = vsel %vm1651, %v1642, %v991
      %v1676 = vsel %vm1651, %v1643, %v993
      %v1677 = vsel %vm1651, %v1644, %v995
      %v1678 = vsel %vm1651, %v1645, %v997
      %v1679 = vsel %vm1651, %v1646, %v999
      %v1680 = vsel %vm1651, %v1647, %v1001
      %v1681 = vsel %vm1651, %v1648, %v1003
      %v1682 = vsel %vm1651, %v1649, %v1005
      %v1683 = vsel %vm1651, %v1650, %v1007
      %vm1684 = vcmask 162816
      %v1685 = vsel %vm1684, %v1652, %v1073
      %v1686 = vsel %vm1684, %v1653, %v1075
      %v1687 = vsel %vm1684, %v1654, %v1077
      %v1688 = vsel %vm1684, %v1655, %v1079
      %v1689 = vsel %vm1684, %v1656, %v1081
      %v1690 = vsel %vm1684, %v1657, %v1083
      %v1691 = vsel %vm1684, %v1658, %v1085
      %v1692 = vsel %vm1684, %v1659, %v1087
      %v1693 = vsel %vm1684, %v1660, %v1089
      %v1694 = vsel %vm1684, %v1661, %v1091
      %v1695 = vsel %vm1684, %v1662, %v1093
      %v1696 = vsel %vm1684, %v1663, %v1095
      %v1697 = vsel %vm1684, %v1664, %v1097
      %v1698 = vsel %vm1684, %v1665, %v1099
      %v1699 = vsel %vm1684, %v1666, %v1101
      %v1700 = vsel %vm1684, %v1667, %v1103
      %v1701 = vsel %vm1684, %v1668, %v1105
      %v1702 = vsel %vm1684, %v1669, %v1107
      %v1703 = vsel %vm1684, %v1670, %v1109
      %v1704 = vsel %vm1684, %v1671, %v1111
      %v1705 = vsel %vm1684, %v1672, %v1113
      %v1706 = vsel %vm1684, %v1673, %v1115
      %v1707 = vsel %vm1684, %v1674, %v1117
      %v1708 = vsel %vm1684, %v1675, %v1119
      %v1709 = vsel %vm1684, %v1676, %v1121
      %v1710 = vsel %vm1684, %v1677, %v1123
      %v1711 = vsel %vm1684, %v1678, %v1125
      %v1712 = vsel %vm1684, %v1679, %v1127
      %v1713 = vsel %vm1684, %v1680, %v1129
      %v1714 = vsel %vm1684, %v1681, %v1131
      %v1715 = vsel %vm1684, %v1682, %v1133
      %v1716 = vsel %vm1684, %v1683, %v1135
      %vm1717 = vcmask 195584
      %v1718 = vsel %vm1717, %v1685, %v1201
      %v1719 = vsel %vm1717, %v1686, %v1203
      %v1720 = vsel %vm1717, %v1687, %v1205
      %v1721 = vsel %vm1717, %v1688, %v1207
      %v1722 = vsel %vm1717, %v1689, %v1209
      %v1723 = vsel %vm1717, %v1690, %v1211
      %v1724 = vsel %vm1717, %v1691, %v1213
      %v1725 = vsel %vm1717, %v1692, %v1215
      %v1726 = vsel %vm1717, %v1693, %v1217
      %v1727 = vsel %vm1717, %v1694, %v1219
      %v1728 = vsel %vm1717, %v1695, %v1221
      %v1729 = vsel %vm1717, %v1696, %v1223
      %v1730 = vsel %vm1717, %v1697, %v1225
      %v1731 = vsel %vm1717, %v1698, %v1227
      %v1732 = vsel %vm1717, %v1699, %v1229
      %v1733 = vsel %vm1717, %v1700, %v1231
      %v1734 = vsel %vm1717, %v1701, %v1233
      %v1735 = vsel %vm1717, %v1702, %v1235
      %v1736 = vsel %vm1717, %v1703, %v1237
      %v1737 = vsel %vm1717, %v1704, %v1239
      %v1738 = vsel %vm1717, %v1705, %v1241
      %v1739 = vsel %vm1717, %v1706, %v1243
      %v1740 = vsel %vm1717, %v1707, %v1245
      %v1741 = vsel %vm1717, %v1708, %v1247
      %v1742 = vsel %vm1717, %v1709, %v1249
      %v1743 = vsel %vm1717, %v1710, %v1251
      %v1744 = vsel %vm1717, %v1711, %v1253
      %v1745 = vsel %vm1717, %v1712, %v1255
      %v1746 = vsel %vm1717, %v1713, %v1257
      %v1747 = vsel %vm1717, %v1714, %v1259
      %v1748 = vsel %vm1717, %v1715, %v1261
      %v1749 = vsel %vm1717, %v1716, %v1263
      %vm1750 = vcmask 228352
      %v1751 = vsel %vm1750, %v1718, %v1329
      %v1752 = vsel %vm1750, %v1719, %v1331
      %v1753 = vsel %vm1750, %v1720, %v1333
      %v1754 = vsel %vm1750, %v1721, %v1335
      %v1755 = vsel %vm1750, %v1722, %v1337
      %v1756 = vsel %vm1750, %v1723, %v1339
      %v1757 = vsel %vm1750, %v1724, %v1341
      %v1758 = vsel %vm1750, %v1725, %v1343
      %v1759 = vsel %vm1750, %v1726, %v1345
      %v1760 = vsel %vm1750, %v1727, %v1347
      %v1761 = vsel %vm1750, %v1728, %v1349
      %v1762 = vsel %vm1750, %v1729, %v1351
      %v1763 = vsel %vm1750, %v1730, %v1353
      %v1764 = vsel %vm1750, %v1731, %v1355
      %v1765 = vsel %vm1750, %v1732, %v1357
      %v1766 = vsel %vm1750, %v1733, %v1359
      %v1767 = vsel %vm1750, %v1734, %v1361
      %v1768 = vsel %vm1750, %v1735, %v1363
      %v1769 = vsel %vm1750, %v1736, %v1365
      %v1770 = vsel %vm1750, %v1737, %v1367
      %v1771 = vsel %vm1750, %v1738, %v1369
      %v1772 = vsel %vm1750, %v1739, %v1371
      %v1773 = vsel %vm1750, %v1740, %v1373
      %v1774 = vsel %vm1750, %v1741, %v1375
      %v1775 = vsel %vm1750, %v1742, %v1377
      %v1776 = vsel %vm1750, %v1743, %v1379
      %v1777 = vsel %vm1750, %v1744, %v1381
      %v1778 = vsel %vm1750, %v1745, %v1383
      %v1779 = vsel %vm1750, %v1746, %v1385
      %v1780 = vsel %vm1750, %v1747, %v1387
      %v1781 = vsel %vm1750, %v1748, %v1389
      %v1782 = vsel %vm1750, %v1749, %v1391
      %vm1783 = vcmask 261120
      %v1784 = vsel %vm1783, %v1751, %v1457
      %v1785 = vsel %vm1783, %v1752, %v1459
      %v1786 = vsel %vm1783, %v1753, %v1461
      %v1787 = vsel %vm1783, %v1754, %v1463
      %v1788 = vsel %vm1783, %v1755, %v1465
      %v1789 = vsel %vm1783, %v1756, %v1467
      %v1790 = vsel %vm1783, %v1757, %v1469
      %v1791 = vsel %vm1783, %v1758, %v1471
      %v1792 = vsel %vm1783, %v1759, %v1473
      %v1793 = vsel %vm1783, %v1760, %v1475
      %v1794 = vsel %vm1783, %v1761, %v1477
      %v1795 = vsel %vm1783, %v1762, %v1479
      %v1796 = vsel %vm1783, %v1763, %v1481
      %v1797 = vsel %vm1783, %v1764, %v1483
      %v1798 = vsel %vm1783, %v1765, %v1485
      %v1799 = vsel %vm1783, %v1766, %v1487
      %v1800 = vsel %vm1783, %v1767, %v1489
      %v1801 = vsel %vm1783, %v1768, %v1491
      %v1802 = vsel %vm1783, %v1769, %v1493
      %v1803 = vsel %vm1783, %v1770, %v1495
      %v1804 = vsel %vm1783, %v1771, %v1497
      %v1805 = vsel %vm1783, %v1772, %v1499
      %v1806 = vsel %vm1783, %v1773, %v1501
      %v1807 = vsel %vm1783, %v1774, %v1503
      %v1808 = vsel %vm1783, %v1775, %v1505
      %v1809 = vsel %vm1783, %v1776, %v1507
      %v1810 = vsel %vm1783, %v1777, %v1509
      %v1811 = vsel %vm1783, %v1778, %v1511
      %v1812 = vsel %vm1783, %v1779, %v1513
      %v1813 = vsel %vm1783, %v1780, %v1515
      %v1814 = vsel %vm1783, %v1781, %v1517
      %v1815 = vsel %vm1783, %v1782, %v1519
      %vm1816 = vcmask 293888
      %v1817 = vsel %vm1816, %v1784, 0.0
      %v1818 = vsel %vm1816, %v1785, 0.0
      %v1819 = vsel %vm1816, %v1786, 0.0
      %v1820 = vsel %vm1816, %v1787, 0.0
      %v1821 = vsel %vm1816, %v1788, 0.0
      %v1822 = vsel %vm1816, %v1789, 0.0
      %v1823 = vsel %vm1816, %v1790, 0.0
      %v1824 = vsel %vm1816, %v1791, 0.0
      %v1825 = vsel %vm1816, %v1792, 0.0
      %v1826 = vsel %vm1816, %v1793, 0.0
      %v1827 = vsel %vm1816, %v1794, 0.0
      %v1828 = vsel %vm1816, %v1795, 0.0
      %v1829 = vsel %vm1816, %v1796, 0.0
      %v1830 = vsel %vm1816, %v1797, 0.0
      %v1831 = vsel %vm1816, %v1798, 0.0
      %v1832 = vsel %vm1816, %v1799, 0.0
      %v1833 = vsel %vm1816, %v1800, 0.0
      %v1834 = vsel %vm1816, %v1801, 0.0
      %v1835 = vsel %vm1816, %v1802, 0.0
      %v1836 = vsel %vm1816, %v1803, 0.0
      %v1837 = vsel %vm1816, %v1804, 0.0
      %v1838 = vsel %vm1816, %v1805, 0.0
      %v1839 = vsel %vm1816, %v1806, 0.0
      %v1840 = vsel %vm1816, %v1807, 0.0
      %v1841 = vsel %vm1816, %v1808, 0.0
      %v1842 = vsel %vm1816, %v1809, 0.0
      %v1843 = vsel %vm1816, %v1810, 0.0
      %v1844 = vsel %vm1816, %v1811, 0.0
      %v1845 = vsel %vm1816, %v1812, 0.0
      %v1846 = vsel %vm1816, %v1813, 0.0
      %v1847 = vsel %vm1816, %v1814, 0.0
      %v1848 = vsel %vm1816, %v1815, 0.0
      %v1849 = vld [vmem:[%s1] sm:$0xff]
      %v1850 = vld [vmem:[%s1 + $0x8] sm:$0xff]
      %v1851 = vld [vmem:[%s1 + $0x10] sm:$0xff]
      %v1852 = vld [vmem:[%s1 + $0x18] sm:$0xff]
      %v1853 = vld [vmem:[%s1 + $0x20] sm:$0xff]
      %v1854 = vld [vmem:[%s1 + $0x28] sm:$0xff]
      %v1855 = vld [vmem:[%s1 + $0x30] sm:$0xff]
      %v1856 = vld [vmem:[%s1 + $0x38] sm:$0xff]
      %v1857 = vld [vmem:[%s1 + $0x40] sm:$0xff]
      %v1858 = vld [vmem:[%s1 + $0x48] sm:$0xff]
      %v1859 = vld [vmem:[%s1 + $0x50] sm:$0xff]
      %v1860 = vld [vmem:[%s1 + $0x58] sm:$0xff]
      %v1861 = vld [vmem:[%s1 + $0x60] sm:$0xff]
      %v1862 = vld [vmem:[%s1 + $0x68] sm:$0xff]
      %v1863 = vld [vmem:[%s1 + $0x70] sm:$0xff]
      %v1864 = vld [vmem:[%s1 + $0x78] sm:$0xff]
      %v1865 = vld [vmem:[%s2] sm:$0x1]
      %v1867 = vlaneseq
      %v1868 = vshrl.u32 %v1867, 7
      %v1869 = vsub.s32 0, %v1868
      %v1870 = vrot.slane %v1865, %v1869
      %1872 = vmatprep.subr.mxu0 0.0
      %1873 = vmatpush1.msra.mxu0 %v1849
      %1874 = vmatprep.subr.mxu0 0.0
      %1875 = vmatpush1.msra.mxu0 %v1850
      %1876 = vmatprep.subr.mxu0 0.0
      %1877 = vmatpush1.msra.mxu0 %v1851
      %1878 = vmatprep.subr.mxu0 0.0
      %1879 = vmatpush1.msra.mxu0 %v1852
      %1880 = vmatprep.subr.mxu0 0.0
      %1881 = vmatpush1.msra.mxu0 %v1853
      %1882 = vmatprep.subr.mxu0 0.0
      %1883 = vmatpush1.msra.mxu0 %v1854
      %1884 = vmatprep.subr.mxu0 0.0
      %1885 = vmatpush1.msra.mxu0 %v1855
      %1886 = vmatprep.subr.mxu0 0.0
      %1887 = vmatpush1.msra.mxu0 %v1856
      %1888 = vmatprep.subr.mxu0 0.0
      %1889 = vmatpush1.msra.mxu0 %v1857
      %1890 = vmatprep.subr.mxu0 0.0
      %1891 = vmatpush1.msra.mxu0 %v1858
      %1892 = vmatprep.subr.mxu0 0.0
      %1893 = vmatpush1.msra.mxu0 %v1859
      %1894 = vmatprep.subr.mxu0 0.0
      %1895 = vmatpush1.msra.mxu0 %v1860
      %1896 = vmatprep.subr.mxu0 0.0
      %1897 = vmatpush1.msra.mxu0 %v1861
      %1898 = vmatprep.subr.mxu0 0.0
      %1899 = vmatpush1.msra.mxu0 %v1862
      %1900 = vmatprep.subr.mxu0 0.0
      %1901 = vmatpush1.msra.mxu0 %v1863
      %1902 = vmatprep.subr.mxu0 0.0
      %1903 = vmatpush1.msra.mxu0 %v1864
      %1904 = vmatprep.subr.mxu0 0.0
      %1905 = vmatpush1.msra.mxu0 0.0
      %1906 = vmatprep.subr.mxu0 0.0
      %1907 = vmatpush1.msra.mxu0 0.0
      %1908 = vmatprep.subr.mxu0 0.0
      %1909 = vmatpush1.msra.mxu0 0.0
      %1910 = vmatprep.subr.mxu0 0.0
      %1911 = vmatpush1.msra.mxu0 0.0
      %1912 = vmatprep.subr.mxu0 0.0
      %1913 = vmatpush1.msra.mxu0 0.0
      %1914 = vmatprep.subr.mxu0 0.0
      %1915 = vmatpush1.msra.mxu0 0.0
      %1916 = vmatprep.subr.mxu0 0.0
      %1917 = vmatpush1.msra.mxu0 0.0
      %1918 = vmatprep.subr.mxu0 0.0
      %1919 = vmatpush1.msra.mxu0 0.0
      %1920 = vmatprep.subr.mxu0 0.0
      %1921 = vmatpush1.msra.mxu0 0.0
      %1922 = vmatprep.subr.mxu0 0.0
      %1923 = vmatpush1.msra.mxu0 0.0
      %1924 = vmatprep.subr.mxu0 0.0
      %1925 = vmatpush1.msra.mxu0 0.0
      %1926 = vmatprep.subr.mxu0 0.0
      %1927 = vmatpush1.msra.mxu0 0.0
      %1928 = vmatprep.subr.mxu0 0.0
      %1929 = vmatpush1.msra.mxu0 0.0
      %1930 = vmatprep.subr.mxu0 0.0
      %1931 = vmatpush1.msra.mxu0 0.0
      %1932 = vmatprep.subr.mxu0 0.0
      %1933 = vmatpush1.msra.mxu0 0.0
      %1934 = vmatprep.subr.mxu0 0.0
      %1935 = vmatpush1.msra.mxu0 0.0
      %1936 = vmatprep.mubr.f32.mxu0 0.0
      %1937 = vmatmul.mubr.f32.gmra.mrb[0].mxu0 %v1817
      %v1938 = vpop.f32.mrb[0].mxu0
      %v1939 = vadd.f32 %v1870, %v1938
      %v1940 = vpop.f32.mrb[0].mxu0
      %1941 = vmatprep.mubr.f32.mxu0 0.0
      %1942 = vmatmul.mubr.f32.gmra.mrb[0].mxu0 %v1818
      %v1943 = vpop.f32.mrb[0].mxu0
      %v1944 = vadd.f32 %v1870, %v1943
      %v1945 = vpop.f32.mrb[0].mxu0
      %1946 = vmatprep.mubr.f32.mxu0 0.0
      %1947 = vmatmul.mubr.f32.gmra.mrb[0].mxu0 %v1819
      %v1948 = vpop.f32.mrb[0].mxu0
      %v1949 = vadd.f32 %v1870, %v1948
      %v1950 = vpop.f32.mrb[0].mxu0
      %1951 = vmatprep.mubr.f32.mxu0 0.0
      %1952 = vmatmul.mubr.f32.gmra.mrb[0].mxu0 %v1820
      %v1953 = vpop.f32.mrb[0].mxu0
      %v1954 = vadd.f32 %v1870, %v1953
      %v1955 = vpop.f32.mrb[0].mxu0
      %1956 = vmatprep.mubr.f32.mxu0 0.0
      %1957 = vmatmul.mubr.f32.gmra.mrb[0].mxu0 %v1821
      %v1958 = vpop.f32.mrb[0].mxu0
      %v1959 = vadd.f32 %v1870, %v1958
      %v1960 = vpop.f32.mrb[0].mxu0
      %1961 = vmatprep.mubr.f32.mxu0 0.0
      %1962 = vmatmul.mubr.f32.gmra.mrb[0].mxu0 %v1822
      %v1963 = vpop.f32.mrb[0].mxu0
      %v1964 = vadd.f32 %v1870, %v1963
      %v1965 = vpop.f32.mrb[0].mxu0
      %1966 = vmatprep.mubr.f32.mxu0 0.0
      %1967 = vmatmul.mubr.f32.gmra.mrb[0].mxu0 %v1823
      %v1968 = vpop.f32.mrb[0].mxu0
      %v1969 = vadd.f32 %v1870, %v1968
      %v1970 = vpop.f32.mrb[0].mxu0
      %1971 = vmatprep.mubr.f32.mxu0 0.0
      %1972 = vmatmul.mubr.f32.gmra.mrb[0].mxu0 %v1824
      %v1973 = vpop.f32.mrb[0].mxu0
      %v1974 = vadd.f32 %v1870, %v1973
      %v1975 = vpop.f32.mrb[0].mxu0
      %1976 = vmatprep.mubr.f32.mxu0 0.0
      %1977 = vmatmul.mubr.f32.gmra.mrb[0].mxu0 %v1825
      %v1978 = vpop.f32.mrb[0].mxu0
      %v1979 = vadd.f32 %v1870, %v1978
      %v1980 = vpop.f32.mrb[0].mxu0
      %1981 = vmatprep.mubr.f32.mxu0 0.0
      %1982 = vmatmul.mubr.f32.gmra.mrb[0].mxu0 %v1826
      %v1983 = vpop.f32.mrb[0].mxu0
      %v1984 = vadd.f32 %v1870, %v1983
      %v1985 = vpop.f32.mrb[0].mxu0
      %1986 = vmatprep.mubr.f32.mxu0 0.0
      %1987 = vmatmul.mubr.f32.gmra.mrb[0].mxu0 %v1827
      %v1988 = vpop.f32.mrb[0].mxu0
      %v1989 = vadd.f32 %v1870, %v1988
      %v1990 = vpop.f32.mrb[0].mxu0
      %1991 = vmatprep.mubr.f32.mxu0 0.0
      %1992 = vmatmul.mubr.f32.gmra.mrb[0].mxu0 %v1828
      %v1993 = vpop.f32.mrb[0].mxu0
      %v1994 = vadd.f32 %v1870, %v1993
      %v1995 = vpop.f32.mrb[0].mxu0
      %1996 = vmatprep.mubr.f32.mxu0 0.0
      %1997 = vmatmul.mubr.f32.gmra.mrb[0].mxu0 %v1829
      %v1998 = vpop.f32.mrb[0].mxu0
      %v1999 = vadd.f32 %v1870, %v1998
      %v2000 = vpop.f32.mrb[0].mxu0
      %2001 = vmatprep.mubr.f32.mxu0 0.0
      %2002 = vmatmul.mubr.f32.gmra.mrb[0].mxu0 %v1830
      %v2003 = vpop.f32.mrb[0].mxu0
      %v2004 = vadd.f32 %v1870, %v2003
      %v2005 = vpop.f32.mrb[0].mxu0
      %2006 = vmatprep.mubr.f32.mxu0 0.0
      %2007 = vmatmul.mubr.f32.gmra.mrb[0].mxu0 %v1831
      %v2008 = vpop.f32.mrb[0].mxu0
      %v2009 = vadd.f32 %v1870, %v2008
      %v2010 = vpop.f32.mrb[0].mxu0
      %2011 = vmatprep.mubr.f32.mxu0 0.0
      %2012 = vmatmul.mubr.f32.gmra.mrb[0].mxu0 %v1832
      %v2013 = vpop.f32.mrb[0].mxu0
      %v2014 = vadd.f32 %v1870, %v2013
      %v2015 = vpop.f32.mrb[0].mxu0
      %2016 = vmatprep.mubr.f32.mxu0 0.0
      %2017 = vmatmul.mubr.f32.gmra.mrb[0].mxu0 %v1833
      %v2018 = vpop.f32.mrb[0].mxu0
      %v2019 = vadd.f32 %v1870, %v2018
      %v2020 = vpop.f32.mrb[0].mxu0
      %2021 = vmatprep.mubr.f32.mxu0 0.0
      %2022 = vmatmul.mubr.f32.gmra.mrb[0].mxu0 %v1834
      %v2023 = vpop.f32.mrb[0].mxu0
      %v2024 = vadd.f32 %v1870, %v2023
      %v2025 = vpop.f32.mrb[0].mxu0
      %2026 = vmatprep.mubr.f32.mxu0 0.0
      %2027 = vmatmul.mubr.f32.gmra.mrb[0].mxu0 %v1835
      %v2028 = vpop.f32.mrb[0].mxu0
      %v2029 = vadd.f32 %v1870, %v2028
      %v2030 = vpop.f32.mrb[0].mxu0
      %2031 = vmatprep.mubr.f32.mxu0 0.0
      %2032 = vmatmul.mubr.f32.gmra.mrb[0].mxu0 %v1836
      %v2033 = vpop.f32.mrb[0].mxu0
      %v2034 = vadd.f32 %v1870, %v2033
      %v2035 = vpop.f32.mrb[0].mxu0
      %2036 = vmatprep.mubr.f32.mxu0 0.0
      %2037 = vmatmul.mubr.f32.gmra.mrb[0].mxu0 %v1837
      %v2038 = vpop.f32.mrb[0].mxu0
      %v2039 = vadd.f32 %v1870, %v2038
      %v2040 = vpop.f32.mrb[0].mxu0
      %2041 = vmatprep.mubr.f32.mxu0 0.0
      %2042 = vmatmul.mubr.f32.gmra.mrb[0].mxu0 %v1838
      %v2043 = vpop.f32.mrb[0].mxu0
      %v2044 = vadd.f32 %v1870, %v2043
      %v2045 = vpop.f32.mrb[0].mxu0
      %2046 = vmatprep.mubr.f32.mxu0 0.0
      %2047 = vmatmul.mubr.f32.gmra.mrb[0].mxu0 %v1839
      %v2048 = vpop.f32.mrb[0].mxu0
      %v2049 = vadd.f32 %v1870, %v2048
      %v2050 = vpop.f32.mrb[0].mxu0
      %2051 = vmatprep.mubr.f32.mxu0 0.0
      %2052 = vmatmul.mubr.f32.gmra.mrb[0].mxu0 %v1840
      %v2053 = vpop.f32.mrb[0].mxu0
      %v2054 = vadd.f32 %v1870, %v2053
      %v2055 = vpop.f32.mrb[0].mxu0
      %2056 = vmatprep.mubr.f32.mxu0 0.0
      %2057 = vmatmul.mubr.f32.gmra.mrb[0].mxu0 %v1841
      %v2058 = vpop.f32.mrb[0].mxu0
      %v2059 = vadd.f32 %v1870, %v2058
      %v2060 = vpop.f32.mrb[0].mxu0
      %2061 = vmatprep.mubr.f32.mxu0 0.0
      %2062 = vmatmul.mubr.f32.gmra.mrb[0].mxu0 %v1842
      %v2063 = vpop.f32.mrb[0].mxu0
      %v2064 = vadd.f32 %v1870, %v2063
      %v2065 = vpop.f32.mrb[0].mxu0
      %2066 = vmatprep.mubr.f32.mxu0 0.0
      %2067 = vmatmul.mubr.f32.gmra.mrb[0].mxu0 %v1843
      %v2068 = vpop.f32.mrb[0].mxu0
      %v2069 = vadd.f32 %v1870, %v2068
      %v2070 = vpop.f32.mrb[0].mxu0
      %2071 = vmatprep.mubr.f32.mxu0 0.0
      %2072 = vmatmul.mubr.f32.gmra.mrb[0].mxu0 %v1844
      %v2073 = vpop.f32.mrb[0].mxu0
      %v2074 = vadd.f32 %v1870, %v2073
      %v2075 = vpop.f32.mrb[0].mxu0
      %2076 = vmatprep.mubr.f32.mxu0 0.0
      %2077 = vmatmul.mubr.f32.gmra.mrb[0].mxu0 %v1845
      %v2078 = vpop.f32.mrb[0].mxu0
      %v2079 = vadd.f32 %v1870, %v2078
      %v2080 = vpop.f32.mrb[0].mxu0
      %2081 = vmatprep.mubr.f32.mxu0 0.0
      %2082 = vmatmul.mubr.f32.gmra.mrb[0].mxu0 %v1846
      %v2083 = vpop.f32.mrb[0].mxu0
      %v2084 = vadd.f32 %v1870, %v2083
      %v2085 = vpop.f32.mrb[0].mxu0
      %2086 = vmatprep.mubr.f32.mxu0 0.0
      %2087 = vmatmul.mubr.f32.gmra.mrb[0].mxu0 %v1847
      %v2088 = vpop.f32.mrb[0].mxu0
      %v2089 = vadd.f32 %v1870, %v2088
      %v2090 = vpop.f32.mrb[0].mxu0
      %2091 = vmatprep.mubr.f32.mxu0 0.0
      %2092 = vmatmul.mubr.f32.gmra.mrb[0].mxu0 %v1848
      %v2093 = vpop.f32.mrb[0].mxu0
      %v2094 = vadd.f32 %v1870, %v2093
      %v2095 = vpop.f32.mrb[0].mxu0
      %2096 = vdwg.mxu0
      %2097 = vst [vmem:[%s223] sm:$0xff] %v1939
      %2098 = vst [vmem:[%s223 + $0x8] sm:$0xff] %v1944
      %2099 = vst [vmem:[%s223 + $0x10] sm:$0xff] %v1949
      %2100 = vst [vmem:[%s223 + $0x18] sm:$0xff] %v1954
      %2101 = vst [vmem:[%s223 + $0x20] sm:$0xff] %v1959
      %2102 = vst [vmem:[%s223 + $0x28] sm:$0xff] %v1964
      %2103 = vst [vmem:[%s223 + $0x30] sm:$0xff] %v1969
      %2104 = vst [vmem:[%s223 + $0x38] sm:$0xff] %v1974
      %2105 = vst [vmem:[%s223 + $0x40] sm:$0xff] %v1979
      %2106 = vst [vmem:[%s223 + $0x48] sm:$0xff] %v1984
      %2107 = vst [vmem:[%s223 + $0x50] sm:$0xff] %v1989
      %2108 = vst [vmem:[%s223 + $0x58] sm:$0xff] %v1994
      %2109 = vst [vmem:[%s223 + $0x60] sm:$0xff] %v1999
      %2110 = vst [vmem:[%s223 + $0x68] sm:$0xff] %v2004
      %2111 = vst [vmem:[%s223 + $0x70] sm:$0xff] %v2009
      %2112 = vst [vmem:[%s223 + $0x78] sm:$0xff] %v2014
      %2113 = vst [vmem:[%s223 + $0x80] sm:$0xff] %v2019
      %2114 = vst [vmem:[%s223 + $0x88] sm:$0xff] %v2024
      %2115 = vst [vmem:[%s223 + $0x90] sm:$0xff] %v2029
      %2116 = vst [vmem:[%s223 + $0x98] sm:$0xff] %v2034
      %2117 = vst [vmem:[%s223 + $0xa0] sm:$0xff] %v2039
      %2118 = vst [vmem:[%s223 + $0xa8] sm:$0xff] %v2044
      %2119 = vst [vmem:[%s223 + $0xb0] sm:$0xff] %v2049
      %2120 = vst [vmem:[%s223 + $0xb8] sm:$0xff] %v2054
      %2121 = vst [vmem:[%s223 + $0xc0] sm:$0xff] %v2059
      %2122 = vst [vmem:[%s223 + $0xc8] sm:$0xff] %v2064
      %2123 = vst [vmem:[%s223 + $0xd0] sm:$0xff] %v2069
      %2124 = vst [vmem:[%s223 + $0xd8] sm:$0xff] %v2074
      %2125 = vst [vmem:[%s223 + $0xe0] sm:$0xff] %v2079
      %2126 = vst [vmem:[%s223 + $0xe8] sm:$0xff] %v2084
      %2127 = vst [vmem:[%s223 + $0xf0] sm:$0xff] %v2089
      %2128 = vst [vmem:[%s223 + $0xf8] sm:$0xff] %v2094
      %v2129 = vadd.f32 %v1939, %v1944
      %v2130 = vadd.f32 %v2129, %v1949
      %v2131 = vadd.f32 %v2130, %v1954
      %v2132 = vadd.f32 %v2131, %v1959
      %v2133 = vadd.f32 %v2132, %v1964
      %v2134 = vadd.f32 %v2133, %v1969
      %v2135 = vadd.f32 %v2134, %v1974
      %v2136 = vadd.f32 %v2135, %v1979
      %v2137 = vadd.f32 %v2136, %v1984
      %v2138 = vadd.f32 %v2137, %v1989
      %v2139 = vadd.f32 %v2138, %v1994
      %v2140 = vadd.f32 %v2139, %v1999
      %v2141 = vadd.f32 %v2140, %v2004
      %v2142 = vadd.f32 %v2141, %v2009
      %v2143 = vadd.f32 %v2142, %v2014
      %v2144 = vadd.f32 %v2143, %v2019
      %v2145 = vadd.f32 %v2144, %v2024
      %v2146 = vadd.f32 %v2145, %v2029
      %v2147 = vadd.f32 %v2146, %v2034
      %v2148 = vadd.f32 %v2147, %v2039
      %v2149 = vadd.f32 %v2148, %v2044
      %v2150 = vadd.f32 %v2149, %v2049
      %v2151 = vadd.f32 %v2150, %v2054
      %v2152 = vadd.f32 %v2151, %v2059
      %v2153 = vadd.f32 %v2152, %v2064
      %v2154 = vadd.f32 %v2153, %v2069
      %v2155 = vadd.f32 %v2154, %v2074
      %v2156 = vadd.f32 %v2155, %v2079
      %v2157 = vadd.f32 %v2156, %v2084
      %v2158 = vadd.f32 %v2157, %v2089
      %v2159 = vadd.f32 %v2158, %v2094
      %v2160 = vrot.slane %v2159, 4
      %v2161 = vadd.f32 %v2159, %v2160
      %v2162 = vrot.slane %v2161, 2
      %v2163 = vadd.f32 %v2161, %v2162
      %v2164 = vrot.slane %v2163, 1
      %v2165 = vadd.f32 %v2163, %v2164
      %v2166 = vmul.f32 %v2165, 0.00390625
      %v2167 = vsub.f32 %v1939, %v2166
      %v2168 = vsub.f32 %v1944, %v2166
      %v2169 = vsub.f32 %v1949, %v2166
      %v2170 = vsub.f32 %v1954, %v2166
      %v2171 = vsub.f32 %v1959, %v2166
      %v2172 = vsub.f32 %v1964, %v2166
      %v2173 = vsub.f32 %v1969, %v2166
      %v2174 = vsub.f32 %v1974, %v2166
      %v2175 = vsub.f32 %v1979, %v2166
      %v2176 = vsub.f32 %v1984, %v2166
      %v2177 = vsub.f32 %v1989, %v2166
      %v2178 = vsub.f32 %v1994, %v2166
      %v2179 = vsub.f32 %v1999, %v2166
      %v2180 = vsub.f32 %v2004, %v2166
      %v2181 = vsub.f32 %v2009, %v2166
      %v2182 = vsub.f32 %v2014, %v2166
      %v2183 = vsub.f32 %v2019, %v2166
      %v2184 = vsub.f32 %v2024, %v2166
      %v2185 = vsub.f32 %v2029, %v2166
      %v2186 = vsub.f32 %v2034, %v2166
      %v2187 = vsub.f32 %v2039, %v2166
      %v2188 = vsub.f32 %v2044, %v2166
      %v2189 = vsub.f32 %v2049, %v2166
      %v2190 = vsub.f32 %v2054, %v2166
      %v2191 = vsub.f32 %v2059, %v2166
      %v2192 = vsub.f32 %v2064, %v2166
      %v2193 = vsub.f32 %v2069, %v2166
      %v2194 = vsub.f32 %v2074, %v2166
      %v2195 = vsub.f32 %v2079, %v2166
      %v2196 = vsub.f32 %v2084, %v2166
      %v2197 = vsub.f32 %v2089, %v2166
      %v2198 = vsub.f32 %v2094, %v2166
      %v2199 = vmul.f32 %v2167, %v2167
      %v2200 = vmul.f32 %v2168, %v2168
      %v2201 = vmul.f32 %v2169, %v2169
      %v2202 = vmul.f32 %v2170, %v2170
      %v2203 = vmul.f32 %v2171, %v2171
      %v2204 = vmul.f32 %v2172, %v2172
      %v2205 = vmul.f32 %v2173, %v2173
      %v2206 = vmul.f32 %v2174, %v2174
      %v2207 = vmul.f32 %v2175, %v2175
      %v2208 = vmul.f32 %v2176, %v2176
      %v2209 = vmul.f32 %v2177, %v2177
      %v2210 = vmul.f32 %v2178, %v2178
      %v2211 = vmul.f32 %v2179, %v2179
      %v2212 = vmul.f32 %v2180, %v2180
      %v2213 = vmul.f32 %v2181, %v2181
      %v2214 = vmul.f32 %v2182, %v2182
      %v2215 = vmul.f32 %v2183, %v2183
      %v2216 = vmul.f32 %v2184, %v2184
      %v2217 = vmul.f32 %v2185, %v2185
      %v2218 = vmul.f32 %v2186, %v2186
      %v2219 = vmul.f32 %v2187, %v2187
      %v2220 = vmul.f32 %v2188, %v2188
      %v2221 = vmul.f32 %v2189, %v2189
      %v2222 = vmul.f32 %v2190, %v2190
      %v2223 = vmul.f32 %v2191, %v2191
      %v2224 = vmul.f32 %v2192, %v2192
      %v2225 = vmul.f32 %v2193, %v2193
      %v2226 = vmul.f32 %v2194, %v2194
      %v2227 = vmul.f32 %v2195, %v2195
      %v2228 = vmul.f32 %v2196, %v2196
      %v2229 = vmul.f32 %v2197, %v2197
      %v2230 = vmul.f32 %v2198, %v2198
      %v2231 = vadd.f32 %v2199, %v2200
      %v2232 = vadd.f32 %v2231, %v2201
      %v2233 = vadd.f32 %v2232, %v2202
      %v2234 = vadd.f32 %v2233, %v2203
      %v2235 = vadd.f32 %v2234, %v2204
      %v2236 = vadd.f32 %v2235, %v2205
      %v2237 = vadd.f32 %v2236, %v2206
      %v2238 = vadd.f32 %v2237, %v2207
      %v2239 = vadd.f32 %v2238, %v2208
      %v2240 = vadd.f32 %v2239, %v2209
      %v2241 = vadd.f32 %v2240, %v2210
      %v2242 = vadd.f32 %v2241, %v2211
      %v2243 = vadd.f32 %v2242, %v2212
      %v2244 = vadd.f32 %v2243, %v2213
      %v2245 = vadd.f32 %v2244, %v2214
      %v2246 = vadd.f32 %v2245, %v2215
      %v2247 = vadd.f32 %v2246, %v2216
      %v2248 = vadd.f32 %v2247, %v2217
      %v2249 = vadd.f32 %v2248, %v2218
      %v2250 = vadd.f32 %v2249, %v2219
      %v2251 = vadd.f32 %v2250, %v2220
      %v2252 = vadd.f32 %v2251, %v2221
      %v2253 = vadd.f32 %v2252, %v2222
      %v2254 = vadd.f32 %v2253, %v2223
      %v2255 = vadd.f32 %v2254, %v2224
      %v2256 = vadd.f32 %v2255, %v2225
      %v2257 = vadd.f32 %v2256, %v2226
      %v2258 = vadd.f32 %v2257, %v2227
      %v2259 = vadd.f32 %v2258, %v2228
      %v2260 = vadd.f32 %v2259, %v2229
      %v2261 = vadd.f32 %v2260, %v2230
      %v2262 = vrot.slane %v2261, 4
      %v2263 = vadd.f32 %v2261, %v2262
      %v2264 = vrot.slane %v2263, 2
      %v2265 = vadd.f32 %v2263, %v2264
      %v2266 = vrot.slane %v2265, 1
      %v2267 = vadd.f32 %v2265, %v2266
      %vm2268 = vcmask 1040384
      %v2269 = vsel %vm2268, %v2165, %v2267
      %2270 = vst [vmem:[%s229] sm:$0x3] %v2269
      %s2271 = sadd.s32 %s20, %s21
      %p2272 = scmp.lt.s32.totalorder %s2271, 1
      %s2273 = scalar_select %p2272, %s2271, 1
      %s2274 = smul.addr %s2273, 32
      %s2275 = smul.addr %s2274, 8
      %s2276 = scalar_lea.vmem %s3, %s2275
      %s2277 = sadd.s32 %s20, %s21
      %p2278 = scmp.lt.s32.totalorder %s2277, 1
      %s2279 = scalar_select %p2278, %s2277, 1
      %s2280 = smul.addr %s2279, 2
      %s2281 = scalar_lea.vmem %s4, %s2280
      // Predicated region
      $region33: #{conv_module_forward.2} parent=31 // pred_check
        %p2282 = pneg %p116
      $region34: #{conv_module_forward.2} parent=31 // pred_check_branch
        %2284 = sbr.rel (%p2282) target = $region36
      $region35: #{conv_module_forward.2} parent=31 // pred_region
        %s2285 = sadd.s32 %s20, %s21
      $region36: #{conv_module_forward.2} parent=31 // pred_fallthru
        _
      // Predicated region
      $region37: #{conv_module_forward.2} parent=31 // pred_check
        %p2286 = pneg %p144
      $region38: #{conv_module_forward.2} parent=31 // pred_check_branch
        %2288 = sbr.rel (%p2286) target = $region40
      $region39: #{conv_module_forward.2} parent=31 // pred_region
        %s2289 = sadd.s32 %s20, %s21
      $region40: #{conv_module_forward.2} parent=31 // pred_fallthru
        _
    $region32: #{conv_module_forward.2} parent=5 // pred_fallthru
      _
    %p2290 = scmp.le.s32.totalorder 2, %s11
    // Predicated region
    $region41: #{conv_module_forward.2} parent=5 // pred_check
      %p2291 = pneg %p2290
    $region42: #{conv_module_forward.2} parent=5 // pred_check_branch
      %2293 = sbr.rel (%p2291) target = $region44
    $region43: #{conv_module_forward.2} parent=5 // pred_region
      %s2294 = ssub.s32 %s11, 2
      // Predicated region
      $region45: #{conv_module_forward.2} parent=43 // pred_check
        %p2295 = pneg %p122
      $region46: #{conv_module_forward.2} parent=43 // pred_check_branch
        %2297 = sbr.rel (%p2295) target = $region48
      $region47: #{conv_module_forward.2} parent=43 // pred_region
        %s2298 = sadd.s32 %s22, %s23
        %p2299 = scmp.lt.s32.totalorder %s2298, 1
        %s2300 = scalar_select %p2299, %s2298, 1
        %s2301 = smul.addr %s2300, 32
        %s2302 = smul.addr %s2301, 8
        %s2303 = scalar_lea.vmem %s3, %s2302
      $region48: #{conv_module_forward.2} parent=43 // pred_fallthru
        _
      // Predicated region
      $region49: #{conv_module_forward.2} parent=43 // pred_check
        %p2304 = pneg %p150
      $region50: #{conv_module_forward.2} parent=43 // pred_check_branch
        %2306 = sbr.rel (%p2304) target = $region52
      $region51: #{conv_module_forward.2} parent=43 // pred_region
        %s2307 = sadd.s32 %s22, %s23
        %p2308 = scmp.lt.s32.totalorder %s2307, 1
        %s2309 = scalar_select %p2308, %s2307, 1
        %s2310 = smul.addr %s2309, 2
        %s2311 = scalar_lea.vmem %s4, %s2310
      $region52: #{conv_module_forward.2} parent=43 // pred_fallthru
        _
    $region44: #{conv_module_forward.2} parent=5 // pred_fallthru
      _
  $region6: #{conv_module_forward.2} parent=0 // loop_footer
    %s15 = sadd.s32 1, %s11
  $region7: #{conv_module_forward.2} parent=0 // loop_footer_branch
    %10 = sbr.rel target = $region3
  $region8: #{conv_module_forward.2} parent=0 // loop_exit
    _

</llo_original>
